<compile_context>
chip_gen: v7x
topology: tpu7x:2x2x1
jax: 0.10.0
libtpu: 0.0.40
codegen_flags: <defaults>
</compile_context>

<pallas_src>
import jax
import jax.numpy as jnp
from jax.experimental import pallas as pl
from jax.experimental.pallas import tpu as pltpu

MLP_HIDDEN = 512
K_REGIONS = 49          # 7 * 7
D_FEAT = 512            # feature dim of img (== mlp_hidden here)

_VMEM_LIMIT_BYTES = 48 * 1024 * 1024   # > v5e's 16 MiB default, < v7x's 64 MiB


def _topdown_attention_kernel(img_ref, q_ref, wv_ref, bv_ref, wq_ref, bq_ref,
                              wl_ref, bl_ref, out_ref):
    """One batch block of attention + re-weighting.

    img_ref : (B_BLK*K, D)  flattened (batch, region) rows, bf16 or f32
    q_ref   : (B_BLK, H)  f32
    wv_ref  : (D, H)   bv_ref : (1, H)      (weights possibly bf16)
    wq_ref  : (H, H)   bq_ref : (1, H)
    wl_ref  : (1, H)   bl_ref : (1, 1)
    out_ref : (B_BLK*K, D)  = att * img
    """
    M, _ = img_ref.shape
    b_blk, _ = q_ref.shape
    k_regions = M // b_blk

    img_c = img_ref[...]                                 # [M, D]  io dtype
    q = q_ref[...]                                       # [B_BLK, H]  f32
    cdt = wv_ref.dtype                                   # MXU operand dtype

    # FCNet projections (Linear + ReLU); dropout is identity at eval.
    # One large MXU matmul over the whole batch block (M = B_BLK*49 rows).
    # bv/bq are [1, H] broadcasts applied once per block on the f32 result.
    v_proj = jnp.maximum(
        jnp.dot(img_c.astype(cdt), wv_ref[...],
                preferred_element_type=jnp.float32) + bv_ref[...], 0.0)     # [M, H]
    q_proj = jnp.maximum(
        jnp.dot(q.astype(cdt), wq_ref[...],
                preferred_element_type=jnp.float32) + bq_ref[...], 0.0)     # [B_BLK, H]

    # Fold the Linear(H -> 1) weight into the q side (done once per block on
    # the small [B_BLK, H] operand).
    qw = q_proj * wl_ref[...]                            # [B_BLK, H]  f32

    # g[m, j] = <v_proj[m], qw[j]>; the valid logit for row m sits in column
    # j = m // K.  bf16 operands (review item), f32 accumulation — small MXU
    # matmul that hides under the Wv matmul.
    #
    # NOTE on the review's "block-diagonal softmax" item: with block_b capped
    # at <= 32 this dense [M, B_BLK] formulation costs ~6% of the Wv matmul on
    # the MXU plus a few hundred VPU/EUP cycles, all hidden under the per-step
    # DMA (>= ~2000 cycles even at v7x bandwidth).  The O(B_BLK^2) restructure
    # only pays if the block is pushed past the VMEM-driven cap, which we
    # deliberately don't do.
    g = jax.lax.dot_general(v_proj.astype(cdt), qw.astype(cdt),
                            (((1,), (1,)), ((), ())),
                            preferred_element_type=jnp.float32)             # [M, B_BLK]
    g = g + bl_ref[0, 0]

    row = jax.lax.broadcasted_iota(jnp.int32, (M, b_blk), 0)
    col = jax.lax.broadcasted_iota(jnp.int32, (M, b_blk), 1)
    t = row - col * k_regions
    valid = (t >= 0) & (t < k_regions)                   # col == row // K
    logits = jnp.where(valid, g, -1e30)

    # Segment softmax over the K rows of each batch element (per column),
    # vectorized across the batch block.  Every column has exactly K valid
    # rows (padded batches still contribute K zero-img rows), so masked
    # entries always underflow to exactly 0 after exp.  All f32.
    m_max = jnp.max(logits, axis=0, keepdims=True)       # [1, B_BLK]
    e = jnp.exp(logits - m_max)                          # masked entries -> 0
    denom = jnp.sum(e, axis=0, keepdims=True)            # [1, B_BLK]
    att_g = e * pl.reciprocal(denom, approx=True)        # [M, B_BLK]
    # Lane-direction sum picks the single non-zero column (row // K) per row.
    att = jnp.sum(att_g, axis=1, keepdims=True)          # [M, 1]

    # Epilogue in f32 regardless of the I/O dtype (v5e VPU has no bf16).
    out_ref[...] = (att * img_c.astype(jnp.float32)).astype(out_ref.dtype)


def _choose_block(B, block_b):
    """Batch elements per grid step.

    Multi-step grids use a multiple of 8 so the flattened B_BLK*K block stays
    8-sublane aligned, and are capped at round8(ceil(B/2)) so there are always
    >= 2 grid steps (feeds both v7x TensorCores via the "parallel" axis).
    """
    if B <= 8:
        return B                                   # single step, block == full extent
    req = max(8, (block_b // 8) * 8)
    half8 = ((-(-B // 2) + 7) // 8) * 8            # round8(ceil(B/2))
    return min(req, half8)


def topdown_attention_bkd(img, q, params, *, block_b=32,
                          matmul_dtype=jnp.bfloat16,
                          io_dtype=None, out_dtype=jnp.float32):
    """Attention re-weighting: returns v_emb = att * img in [B, K, D] layout.

    img          : [B, K, D]  (pass bf16 activations to halve the dominant HBM
                   stream; the kernel reads it in its native dtype)
    q            : [B, H] f32
    block_b      : batch elements per grid step (default 32; see _choose_block)
    matmul_dtype : MXU operand dtype (bf16 recommended on all generations;
                   accumulation, softmax and the epilogue stay f32)
    io_dtype     : optional override for the img dtype fed to the kernel
                   (default: img.dtype — keep the cast with the producer)
    out_dtype    : dtype of the v_emb output block (f32 default)
    """
    B, K, D = img.shape
    H = q.shape[1]
    wv, bv, wq, bq, wl, bl = params

    b_blk = _choose_block(B, block_b)
    b_pad = -(-B // b_blk) * b_blk

    img_p = img if b_pad == B else jnp.pad(img, ((0, b_pad - B), (0, 0), (0, 0)))
    q_p = q if b_pad == B else jnp.pad(q, ((0, b_pad - B), (0, 0)))

    img2d = img_p.reshape(b_pad * K, D)        # free (contiguous) HBM reshape
    if io_dtype is not None and img2d.dtype != io_dtype:
        img2d = img2d.astype(io_dtype)

    cdt = matmul_dtype
    wv_c = wv.astype(cdt)
    wq_c = wq.astype(cdt)

    m_blk = b_blk * K
    grid = (b_pad // b_blk,)

    # TODO(synk): once validated on the target jax version, mark the six
    # grid-invariant weight/bias specs with pipeline_mode=pl.Buffered(1) to
    # single-buffer them (saves ~1-2 MB of double-buffered VMEM, most useful
    # on v7x's 64 MiB).
    v_emb2d = pl.pallas_call(
        _topdown_attention_kernel,
        out_shape=jax.ShapeDtypeStruct((b_pad * K, D), out_dtype),
        grid_spec=pltpu.PrefetchScalarGridSpec(
            num_scalar_prefetch=0,
            grid=grid,
            in_specs=[
                pl.BlockSpec((m_blk, D), lambda i: (i, 0)),   # img (flattened)
                pl.BlockSpec((b_blk, H), lambda i: (i, 0)),   # q
                pl.BlockSpec((D, H),     lambda i: (0, 0)),   # Wv (grid-invariant)
                pl.BlockSpec((1, H),     lambda i: (0, 0)),   # bv
                pl.BlockSpec((H, H),     lambda i: (0, 0)),   # Wq
                pl.BlockSpec((1, H),     lambda i: (0, 0)),   # bq
                pl.BlockSpec((1, H),     lambda i: (0, 0)),   # w_lin
                pl.BlockSpec((1, 1),     lambda i: (0, 0)),   # b_lin
            ],
            out_specs=pl.BlockSpec((m_blk, D), lambda i: (i, 0)),
        ),
        compiler_params=pltpu.CompilerParams(
            dimension_semantics=("parallel",),
            vmem_limit_bytes=_VMEM_LIMIT_BYTES),
    )(img2d, q_p, wv_c, bv, wq_c, bq, wl, bl)

    return v_emb2d.reshape(b_pad, K, D)[:B]    # drop batch padding, [B, K, D]


def topdown_forward(img, q, params, **kwargs):
    """Exact TopDown.forward semantics: permute(0,2,1).view(-1, K*D) + cat(q)."""
    B, K, D = img.shape
    v_emb = topdown_attention_bkd(img, q, params, **kwargs)
    # TODO(synk): in production, fold this (0,2,1) permutation into the first
    # downstream Linear's weight layout (one-time row reorder at init) and
    # consume `topdown_attention_bkd` directly — the transpose below
    # re-streams the whole [B, K, D] v_emb through HBM, nearly doubling the
    # cost of this HBM-bound op on every TPU generation.
    v_emb_t = jnp.transpose(v_emb, (0, 2, 1)).reshape(B, K * D)
    return jnp.concatenate([v_emb_t, q.astype(v_emb_t.dtype)], axis=-1)


def _reference_forward(img, q, params, matmul_dtype=jnp.float32):
    """Plain-JAX reference with the same operand casting as the kernel."""
    wv, bv, wq, bq, wl, bl = params
    v_proj = jnp.maximum(
        jnp.einsum("bkd,dh->bkh", img.astype(matmul_dtype), wv.astype(matmul_dtype),
                   preferred_element_type=jnp.float32) + bv, 0.0)
    q_proj = jnp.maximum(
        jnp.dot(q.astype(matmul_dtype), wq.astype(matmul_dtype),
                preferred_element_type=jnp.float32) + bq, 0.0)
    joint = v_proj * q_proj[:, None, :]
    logits = jnp.sum(joint * wl[None, :, :], axis=-1, keepdims=True) + bl[0, 0]
    att = jax.nn.softmax(logits, axis=1)
    v_emb = att * img.astype(jnp.float32)
    B, K, D = img.shape
    v_emb_t = jnp.transpose(v_emb, (0, 2, 1)).reshape(B, K * D)
    return jnp.concatenate([v_emb_t, q], axis=-1)


if __name__ == "__main__":
    key = jax.random.PRNGKey(0)
    k_img, k_q, k_wv, k_wq, k_wl = jax.random.split(key, 5)

    # Deterministic synthetic parameters (shapes from PropAttention(512, 512, 512)).
    wv = jax.random.normal(k_wv, (D_FEAT, MLP_HIDDEN), jnp.float32) * 0.02
    bv = jnp.zeros((1, MLP_HIDDEN), jnp.float32)
    wq = jax.random.normal(k_wq, (MLP_HIDDEN, MLP_HIDDEN), jnp.float32) * 0.02
    bq = jnp.zeros((1, MLP_HIDDEN), jnp.float32)
    wl = jax.random.normal(k_wl, (1, MLP_HIDDEN), jnp.float32) * 0.02
    bl = jnp.zeros((1, 1), jnp.float32)
    params = (wv, bv, wq, bq, wl, bl)

    # --- 1) small batch, single grid step, all-f32 (exactness check) --------
    B = 2
    img = jax.random.normal(k_img, (B, K_REGIONS, D_FEAT), jnp.float32)
    q = jax.random.normal(k_q, (B, MLP_HIDDEN), jnp.float32)

    out = jax.block_until_ready(
        topdown_forward(img, q, params, matmul_dtype=jnp.float32))
    assert out.shape == (B, K_REGIONS * D_FEAT + MLP_HIDDEN), out.shape
    ref = _reference_forward(img, q, params, matmul_dtype=jnp.float32)
    assert jnp.allclose(out, ref, atol=2e-3, rtol=2e-3), "f32 mismatch"

    # --- 2) bf16 activations + bf16 MXU operands (recommended config) -------
    img_bf = img.astype(jnp.bfloat16)   # stands in for bf16 activations upstream
    out_bf = jax.block_until_ready(
        topdown_forward(img_bf, q, params, matmul_dtype=jnp.bfloat16))
    ref_bf = _reference_forward(img_bf, q, params, matmul_dtype=jnp.bfloat16)
    assert jnp.allclose(out_bf, ref_bf, atol=1e-2, rtol=1e-2), "bf16 mismatch"

    # --- 3) larger batch: padding + >= 2 grid steps (feeds both v7x TCs) ----
    B2 = 20
    img2 = jax.random.normal(jax.random.fold_in(key, 1),
                             (B2, K_REGIONS, D_FEAT), jnp.float32).astype(jnp.bfloat16)
    q2 = jax.random.normal(jax.random.fold_in(key, 2),
                           (B2, MLP_HIDDEN), jnp.float32)
    out2 = jax.block_until_ready(
        topdown_forward(img2, q2, params, block_b=32, matmul_dtype=jnp.bfloat16))
    ref2 = _reference_forward(img2, q2, params, matmul_dtype=jnp.bfloat16)
    assert out2.shape == (B2, K_REGIONS * D_FEAT + MLP_HIDDEN), out2.shape
    assert jnp.allclose(out2, ref2, atol=1e-2, rtol=1e-2), "batched bf16 mismatch"

    # --- 4) layout-folded entry point (no post-kernel transpose) ------------
    v_bkd = jax.block_until_ready(
        topdown_attention_bkd(img_bf, q, params, matmul_dtype=jnp.bfloat16))
    assert v_bkd.shape == (B, K_REGIONS, D_FEAT), v_bkd.shape

    print("KERNEL_OK")
</pallas_src>

<mosaic_0001>
module attributes {stable_mosaic.version = 11 : i64} {
  func.func @_topdown_attention_kernel(%arg0: i32, %arg1: memref<98x512xf32, #tpu.memory_space<vmem>>, %arg2: memref<2x512xf32, #tpu.memory_space<vmem>>, %arg3: memref<512x512xf32, #tpu.memory_space<vmem>>, %arg4: memref<1x512xf32, #tpu.memory_space<vmem>>, %arg5: memref<512x512xf32, #tpu.memory_space<vmem>>, %arg6: memref<1x512xf32, #tpu.memory_space<vmem>>, %arg7: memref<1x512xf32, #tpu.memory_space<vmem>>, %arg8: memref<1x1xf32, #tpu.memory_space<vmem>>, %arg9: memref<98x512xf32, #tpu.memory_space<vmem>>) attributes {dimension_semantics = [#tpu.dimension_semantics<parallel>], iteration_bounds = array<i64: 1>, scalar_prefetch = 0 : i64, scratch_operands = 0 : i64, tpu.core_type = #tpu.core_type<tc>, window_params = [{transform_indices = @transform_0, window_bounds = array<i64: 98, 512>}, {transform_indices = @transform_1, window_bounds = array<i64: 2, 512>}, {pipeline_mode = #tpu.pipeline_mode<synchronous>, transform_indices = @transform_2, window_bounds = array<i64: 512, 512>}, {pipeline_mode = #tpu.pipeline_mode<synchronous>, transform_indices = @transform_3, window_bounds = array<i64: 1, 512>}, {pipeline_mode = #tpu.pipeline_mode<synchronous>, transform_indices = @transform_4, window_bounds = array<i64: 512, 512>}, {pipeline_mode = #tpu.pipeline_mode<synchronous>, transform_indices = @transform_5, window_bounds = array<i64: 1, 512>}, {pipeline_mode = #tpu.pipeline_mode<synchronous>, transform_indices = @transform_6, window_bounds = array<i64: 1, 512>}, {pipeline_mode = #tpu.pipeline_mode<synchronous>, transform_indices = @transform_7, window_bounds = array<i64: 1, 1>}, {transform_indices = @transform_8, window_bounds = array<i64: 98, 512>}]} {
    %c0 = arith.constant 0 : index
    %c0_0 = arith.constant 0 : index
    %0 = vector.load %arg1[%c0, %c0_0] : memref<98x512xf32, #tpu.memory_space<vmem>>, vector<98x512xf32>
    %c0_1 = arith.constant 0 : index
    %c0_2 = arith.constant 0 : index
    %1 = vector.load %arg2[%c0_1, %c0_2] : memref<2x512xf32, #tpu.memory_space<vmem>>, vector<2x512xf32>
    %c0_3 = arith.constant 0 : index
    %c0_4 = arith.constant 0 : index
    %2 = vector.load %arg3[%c0_3, %c0_4] : memref<512x512xf32, #tpu.memory_space<vmem>>, vector<512x512xf32>
    %cst = arith.constant dense<0.000000e+00> : vector<98x512xf32>
    %3 = tpu.matmul %0, %2, %cst {dimension_numbers = #tpu.dot_dimension_numbers<[1], [0], [0], [1], [0, 0, 1, 1], [], []>} : vector<98x512xf32>, vector<512x512xf32>, vector<98x512xf32> -> vector<98x512xf32>
    %c0_5 = arith.constant 0 : index
    %c0_6 = arith.constant 0 : index
    %4 = vector.load %arg4[%c0_5, %c0_6] : memref<1x512xf32, #tpu.memory_space<vmem>>, vector<1x512xf32>
    %5 = vector.broadcast %4 : vector<1x512xf32> to vector<98x512xf32>
    %6 = arith.addf %3, %5 : vector<98x512xf32>
    %cst_7 = arith.constant 0.000000e+00 : f32
    %7 = vector.broadcast %cst_7 : f32 to vector<98x512xf32>
    %8 = arith.maximumf %6, %7 : vector<98x512xf32>
    %c0_8 = arith.constant 0 : index
    %c0_9 = arith.constant 0 : index
    %9 = vector.load %arg5[%c0_8, %c0_9] : memref<512x512xf32, #tpu.memory_space<vmem>>, vector<512x512xf32>
    %cst_10 = arith.constant dense<0.000000e+00> : vector<2x512xf32>
    %10 = tpu.matmul %1, %9, %cst_10 {dimension_numbers = #tpu.dot_dimension_numbers<[1], [0], [0], [1], [0, 0, 1, 1], [], []>} : vector<2x512xf32>, vector<512x512xf32>, vector<2x512xf32> -> vector<2x512xf32>
    %c0_11 = arith.constant 0 : index
    %c0_12 = arith.constant 0 : index
    %11 = vector.load %arg6[%c0_11, %c0_12] : memref<1x512xf32, #tpu.memory_space<vmem>>, vector<1x512xf32>
    %12 = vector.broadcast %11 : vector<1x512xf32> to vector<2x512xf32>
    %13 = arith.addf %10, %12 : vector<2x512xf32>
    %cst_13 = arith.constant 0.000000e+00 : f32
    %14 = vector.broadcast %cst_13 : f32 to vector<2x512xf32>
    %15 = arith.maximumf %13, %14 : vector<2x512xf32>
    %c0_14 = arith.constant 0 : index
    %c0_15 = arith.constant 0 : index
    %16 = vector.load %arg7[%c0_14, %c0_15] : memref<1x512xf32, #tpu.memory_space<vmem>>, vector<1x512xf32>
    %17 = vector.broadcast %16 : vector<1x512xf32> to vector<2x512xf32>
    %18 = arith.mulf %15, %17 : vector<2x512xf32>
    %cst_16 = arith.constant dense<0.000000e+00> : vector<98x2xf32>
    %19 = tpu.matmul %8, %18, %cst_16 {dimension_numbers = #tpu.dot_dimension_numbers<[1], [1], [0], [0], [0, 0, 1, 0], [], []>} : vector<98x512xf32>, vector<2x512xf32>, vector<98x2xf32> -> vector<98x2xf32>
    %c0_17 = arith.constant 0 : index
    %c0_18 = arith.constant 0 : index
    %20 = vector.load %arg8[%c0_17, %c0_18] : memref<1x1xf32, #tpu.memory_space<vmem>>, vector<1x1xf32>
    %21 = vector.extract %20[0, 0] : f32 from vector<1x1xf32>
    %22 = vector.broadcast %21 : f32 to vector<98x2xf32>
    %23 = arith.addf %19, %22 : vector<98x2xf32>
    %24 = tpu.iota {dimensions = array<i32: 0>} : vector<98x2xi32>
    %25 = tpu.iota {dimensions = array<i32: 1>} : vector<98x2xi32>
    %c49_i32 = arith.constant 49 : i32
    %26 = vector.broadcast %c49_i32 : i32 to vector<98x2xi32>
    %27 = arith.muli %25, %26 : vector<98x2xi32>
    %28 = arith.subi %24, %27 : vector<98x2xi32>
    %c0_i32 = arith.constant 0 : i32
    %29 = vector.broadcast %c0_i32 : i32 to vector<98x2xi32>
    %30 = arith.cmpi sge, %28, %29 : vector<98x2xi32>
    %c49_i32_19 = arith.constant 49 : i32
    %31 = vector.broadcast %c49_i32_19 : i32 to vector<98x2xi32>
    %32 = arith.cmpi slt, %28, %31 : vector<98x2xi32>
    %33 = arith.andi %30, %32 : vector<98x2xi1>
    %cst_20 = arith.constant -1.000000e+30 : f32
    %34 = vector.broadcast %cst_20 : f32 to vector<98x2xf32>
    %35 = arith.select %33, %23, %34 : vector<98x2xi1>, vector<98x2xf32>
    %cst_21 = arith.constant dense<0xFF800000> : vector<2xf32>
    %36 = vector.multi_reduction <maximumf>, %35, %cst_21 [0] : vector<98x2xf32> to vector<2xf32>
    %37 = vector.shape_cast %36 : vector<2xf32> to vector<1x2xf32>
    %38 = vector.broadcast %37 : vector<1x2xf32> to vector<98x2xf32>
    %39 = arith.subf %35, %38 : vector<98x2xf32>
    %40 = math.exp %39 : vector<98x2xf32>
    %cst_22 = arith.constant dense<0.000000e+00> : vector<2xf32>
    %41 = vector.multi_reduction <add>, %40, %cst_22 [0] : vector<98x2xf32> to vector<2xf32>
    %42 = vector.shape_cast %41 : vector<2xf32> to vector<1x2xf32>
    %43 = tpu.reciprocal %42 {approx = true} : vector<1x2xf32> -> vector<1x2xf32>
    %44 = vector.broadcast %43 : vector<1x2xf32> to vector<98x2xf32>
    %45 = arith.mulf %40, %44 : vector<98x2xf32>
    %cst_23 = arith.constant dense<0.000000e+00> : vector<98xf32>
    %46 = vector.multi_reduction <add>, %45, %cst_23 [1] : vector<98x2xf32> to vector<98xf32>
    %47 = vector.shape_cast %46 : vector<98xf32> to vector<98x1xf32>
    %48 = vector.broadcast %47 : vector<98x1xf32> to vector<98x512xf32>
    %49 = arith.mulf %48, %0 : vector<98x512xf32>
    %c0_24 = arith.constant 0 : index
    %c0_25 = arith.constant 0 : index
    %50 = vector.load %arg9[%c0_24, %c0_25] : memref<98x512xf32, #tpu.memory_space<vmem>>, vector<98x512xf32>
    tpu.vector_store %arg9[%c0_24, %c0_25], %49 {strides = array<i32>} : memref<98x512xf32, #tpu.memory_space<vmem>>, vector<98x512xf32>,
    return
  }
  func.func @transform_0(%arg0: i32) -> (i32, i32) {
    %c0_i32 = arith.constant 0 : i32
    %c0_i32_0 = arith.constant 0 : i32
    return %arg0, %c0_i32 : i32, i32
  }
  func.func @transform_1(%arg0: i32) -> (i32, i32) {
    %c0_i32 = arith.constant 0 : i32
    %c0_i32_0 = arith.constant 0 : i32
    return %arg0, %c0_i32 : i32, i32
  }
  func.func @transform_2(%arg0: i32) -> (i32, i32) {
    %c0_i32 = arith.constant 0 : i32
    %c0_i32_0 = arith.constant 0 : i32
    %c0_i32_1 = arith.constant 0 : i32
    return %c0_i32, %c0_i32_0 : i32, i32
  }
  func.func @transform_3(%arg0: i32) -> (i32, i32) {
    %c0_i32 = arith.constant 0 : i32
    %c0_i32_0 = arith.constant 0 : i32
    %c0_i32_1 = arith.constant 0 : i32
    return %c0_i32, %c0_i32_0 : i32, i32
  }
  func.func @transform_4(%arg0: i32) -> (i32, i32) {
    %c0_i32 = arith.constant 0 : i32
    %c0_i32_0 = arith.constant 0 : i32
    %c0_i32_1 = arith.constant 0 : i32
    return %c0_i32, %c0_i32_0 : i32, i32
  }
  func.func @transform_5(%arg0: i32) -> (i32, i32) {
    %c0_i32 = arith.constant 0 : i32
    %c0_i32_0 = arith.constant 0 : i32
    %c0_i32_1 = arith.constant 0 : i32
    return %c0_i32, %c0_i32_0 : i32, i32
  }
  func.func @transform_6(%arg0: i32) -> (i32, i32) {
    %c0_i32 = arith.constant 0 : i32
    %c0_i32_0 = arith.constant 0 : i32
    %c0_i32_1 = arith.constant 0 : i32
    return %c0_i32, %c0_i32_0 : i32, i32
  }
  func.func @transform_7(%arg0: i32) -> (i32, i32) {
    %c0_i32 = arith.constant 0 : i32
    %c0_i32_0 = arith.constant 0 : i32
    %c0_i32_1 = arith.constant 0 : i32
    return %c0_i32, %c0_i32_0 : i32, i32
  }
  func.func @transform_8(%arg0: i32) -> (i32, i32) {
    %c0_i32 = arith.constant 0 : i32
    %c0_i32_0 = arith.constant 0 : i32
    return %arg0, %c0_i32 : i32, i32
  }
}

</mosaic_0001>

<llo_original>
// kernel: tpu_custom_call.1
$region0: #{tpu_custom_call.1}
  #allocation0 [shape = 'u32[]', space=smem, size = 0x4, offset = 0x4, fixed_abs, tag = 'smem constant byte address 0x4 - core index']
  #allocation1 [shape = 'u32[144,128]{1,0:T(1,128)}', space=vmem, size = 0x12000, scoped, tag = 'internal scratch']
  #allocation2 [shape = 'f32[1,1]{1,0:T(1,128)S(1)}', space=vmem, size = 0x200, scoped, tag = 'scoped memory for tpu_custom_call.1']
  %s0 = inlined_call_operand.hbm [shape: f32[98,512], index: 0, kind: input, shape index: {}]
  %s1 = inlined_call_operand.hbm [shape: f32[2,512], index: 1, kind: input, shape index: {}]
  %s2 = inlined_call_operand.hbm [shape: f32[512,512], index: 2, kind: input, shape index: {}]
  %s3 = inlined_call_operand.vmem [shape: f32[1,512], index: 3, kind: input, shape index: {}]
  %s4 = inlined_call_operand.hbm [shape: f32[512,512], index: 4, kind: input, shape index: {}]
  %s5 = inlined_call_operand.vmem [shape: f32[1,512], index: 5, kind: input, shape index: {}]
  %s6 = inlined_call_operand.vmem [shape: f32[1,512], index: 6, kind: input, shape index: {}]
  %s7 = inlined_call_operand.<no memory space> [shape: f32[1,1], index: 7, kind: input, shape index: {}]
  %s8 = inlined_call_operand.hbm [shape: f32[98,512], index: 8, kind: output, shape index: {}]
  %s9 = sld [smem:[#allocation0]]
  $region58: #{tpu_custom_call.1} parent=0
    _
  %s11 = ssub.s32 1, %s9
  %s12 = scalar_select 0, %s11, %s9
  %v13 = vstv %s7
  %14 = vst [vmem:[#allocation2] sm:$0x1] %v13
  $region1: #{tpu_custom_call.1} parent=0
    #allocation3 [shape = 'u8[212992]{0}', space=vmem, size = 0x34000, scoped, tag = 'input window, operand 0, single buffered']
    #allocation4 [shape = 's32[1]{0}', space=sflag, size = 0x4, scoped, tag = 'scoped memory for tpu_custom_call.1']
    #allocation5 [shape = 's32[1]{0}', space=sflag, size = 0x4, scoped, tag = 'scoped memory for tpu_custom_call.1']
    #allocation6 [shape = 'u8[4096]{0}', space=vmem, size = 0x1000, scoped, tag = 'input window, operand 1, single buffered']
    #allocation7 [shape = 's32[1]{0}', space=sflag, size = 0x4, scoped, tag = 'scoped memory for tpu_custom_call.1']
    #allocation8 [shape = 'u8[1048576]{0}', space=vmem, size = 0x100000, scoped, tag = 'input window, operand 2, single buffered']
    #allocation9 [shape = 'u8[1048576]{0}', space=vmem, size = 0x100000, scoped, tag = 'input window, operand 4, single buffered']
    #allocation10 [shape = 's32[1]{0}', space=sflag, size = 0x4, scoped, tag = 'scoped memory for tpu_custom_call.1']
    #allocation11 [shape = 'u8[212992]{0}', space=vmem, size = 0x34000, scoped, tag = 'output window, operand 0, single buffered']
    %15 = vsyncpa [#allocation4], 0
    %16 = vsyncpa [#allocation7], 0
    %17 = vsyncpa [#allocation10], 0
    %18 = vsyncpa [#allocation5], 0
    // Predicated region
    $region2: #{tpu_custom_call.1} parent=1 // pred_check
      _
    $region3: #{tpu_custom_call.1} parent=1 // pred_check_branch
      %20 = sbr.rel (0) target = $region5
    $region4: #{tpu_custom_call.1} parent=1 // pred_region
      %s22 = ssub.s32 6656, 6656
      %23 = vsyncadd [#allocation4], %s22
      %s24 = sshll.u32 [#allocation3], 4
      %s25 = int_to_ptr.vmem [resolvable:$true] %s24
      %30 = dma.hbm_to_vmem [thread:$0]  %s0, 6656, %s25, [#allocation4], 512, 512, 32
    $region5: #{tpu_custom_call.1} parent=1 // pred_fallthru
      _
    // Predicated region
    $region6: #{tpu_custom_call.1} parent=1 // pred_check
      _
    $region7: #{tpu_custom_call.1} parent=1 // pred_check_branch
      %32 = sbr.rel (0) target = $region9
    $region8: #{tpu_custom_call.1} parent=1 // pred_region
      %s34 = ssub.s32 128, 128
      %35 = vsyncadd [#allocation7], %s34
      %s37 = sshll.u32 [#allocation6], 4
      %s38 = int_to_ptr.vmem [resolvable:$true] %s37
      %40 = dma.hbm_to_vmem [thread:$0]  %s1, 128, %s38, [#allocation7]
    $region9: #{tpu_custom_call.1} parent=1 // pred_fallthru
      _
    // Predicated region
    $region10: #{tpu_custom_call.1} parent=1 // pred_check
      _
    $region11: #{tpu_custom_call.1} parent=1 // pred_check_branch
      %42 = sbr.rel (0) target = $region13
    $region12: #{tpu_custom_call.1} parent=1 // pred_region
      %s44 = ssub.s32 32768, 32768
      %45 = vsyncadd [#allocation7], %s44
      %s46 = sshll.u32 [#allocation8], 4
      %s47 = int_to_ptr.vmem [resolvable:$true] %s46
      %52 = dma.hbm_to_vmem [thread:$0]  %s2, 32768, %s47, [#allocation7], 512, 512, 32
    $region13: #{tpu_custom_call.1} parent=1 // pred_fallthru
      _
    // Predicated region
    $region14: #{tpu_custom_call.1} parent=1 // pred_check
      _
    $region15: #{tpu_custom_call.1} parent=1 // pred_check_branch
      %54 = sbr.rel (0) target = $region17
    $region16: #{tpu_custom_call.1} parent=1 // pred_region
      _
    $region17: #{tpu_custom_call.1} parent=1 // pred_fallthru
      _
    // Predicated region
    $region18: #{tpu_custom_call.1} parent=1 // pred_check
      _
    $region19: #{tpu_custom_call.1} parent=1 // pred_check_branch
      %56 = sbr.rel (0) target = $region21
    $region20: #{tpu_custom_call.1} parent=1 // pred_region
      %s58 = ssub.s32 32768, 32768
      %59 = vsyncadd [#allocation10], %s58
      %s60 = sshll.u32 [#allocation9], 4
      %s61 = int_to_ptr.vmem [resolvable:$true] %s60
      %66 = dma.hbm_to_vmem [thread:$0]  %s4, 32768, %s61, [#allocation10], 512, 512, 32
    $region21: #{tpu_custom_call.1} parent=1 // pred_fallthru
      _
    // Predicated region
    $region22: #{tpu_custom_call.1} parent=1 // pred_check
      _
    $region23: #{tpu_custom_call.1} parent=1 // pred_check_branch
      %68 = sbr.rel (0) target = $region25
    $region24: #{tpu_custom_call.1} parent=1 // pred_region
      _
    $region25: #{tpu_custom_call.1} parent=1 // pred_fallthru
      _
    // Predicated region
    $region26: #{tpu_custom_call.1} parent=1 // pred_check
      _
    $region27: #{tpu_custom_call.1} parent=1 // pred_check_branch
      %70 = sbr.rel (0) target = $region29
    $region28: #{tpu_custom_call.1} parent=1 // pred_region
      _
    $region29: #{tpu_custom_call.1} parent=1 // pred_fallthru
      _
    // Predicated region
    $region30: #{tpu_custom_call.1} parent=1 // pred_check
      _
    $region31: #{tpu_custom_call.1} parent=1 // pred_check_branch
      %72 = sbr.rel (0) target = $region33
    $region32: #{tpu_custom_call.1} parent=1 // pred_region
      _
    $region33: #{tpu_custom_call.1} parent=1 // pred_fallthru
      _
    // Predicated region
    $region34: #{tpu_custom_call.1} parent=1 // pred_check
      _
    $region35: #{tpu_custom_call.1} parent=1 // pred_check_branch
      %74 = sbr.rel (0) target = $region37
    $region36: #{tpu_custom_call.1} parent=1 // pred_region
      %75 = dma.done [#allocation4], 6656
    $region37: #{tpu_custom_call.1} parent=1 // pred_fallthru
      _
    // Predicated region
    $region38: #{tpu_custom_call.1} parent=1 // pred_check
      _
    $region39: #{tpu_custom_call.1} parent=1 // pred_check_branch
      %77 = sbr.rel (0) target = $region41
    $region40: #{tpu_custom_call.1} parent=1 // pred_region
      %78 = dma.done [#allocation7], 128
    $region41: #{tpu_custom_call.1} parent=1 // pred_fallthru
      _
    // Predicated region
    $region42: #{tpu_custom_call.1} parent=1 // pred_check
      _
    $region43: #{tpu_custom_call.1} parent=1 // pred_check_branch
      %80 = sbr.rel (0) target = $region45
    $region44: #{tpu_custom_call.1} parent=1 // pred_region
      %81 = dma.done [#allocation7], 32768
    $region45: #{tpu_custom_call.1} parent=1 // pred_fallthru
      _
    // Predicated region
    $region46: #{tpu_custom_call.1} parent=1 // pred_check
      _
    $region47: #{tpu_custom_call.1} parent=1 // pred_check_branch
      %83 = sbr.rel (0) target = $region49
    $region48: #{tpu_custom_call.1} parent=1 // pred_region
      %84 = dma.done [#allocation10], 32768
    $region49: #{tpu_custom_call.1} parent=1 // pred_fallthru
      _
    %v85 = vld [vmem:[#allocation3] sm:$0xff]
    %v86 = vld [vmem:[#allocation3 + $0x8] sm:$0xff]
    %v87 = vld [vmem:[#allocation3 + $0x10] sm:$0xff]
    %v88 = vld [vmem:[#allocation3 + $0x18] sm:$0xff]
    %v89 = vld [vmem:[#allocation3 + $0x20] sm:$0xff]
    %v90 = vld [vmem:[#allocation3 + $0x28] sm:$0xff]
    %v91 = vld [vmem:[#allocation3 + $0x30] sm:$0xff]
    %v92 = vld [vmem:[#allocation3 + $0x38] sm:$0xff]
    %v93 = vld [vmem:[#allocation3 + $0x40] sm:$0xff]
    %v94 = vld [vmem:[#allocation3 + $0x48] sm:$0xff]
    %v95 = vld [vmem:[#allocation3 + $0x50] sm:$0xff]
    %v96 = vld [vmem:[#allocation3 + $0x58] sm:$0xff]
    %v97 = vld [vmem:[#allocation3 + $0x60] sm:$0xff]
    %v98 = vld [vmem:[#allocation3 + $0x68] sm:$0xff]
    %v99 = vld [vmem:[#allocation3 + $0x70] sm:$0xff]
    %v100 = vld [vmem:[#allocation3 + $0x78] sm:$0xff]
    %v101 = vld [vmem:[#allocation3 + $0x80] sm:$0xff]
    %v102 = vld [vmem:[#allocation3 + $0x88] sm:$0xff]
    %v103 = vld [vmem:[#allocation3 + $0x90] sm:$0xff]
    %v104 = vld [vmem:[#allocation3 + $0x98] sm:$0xff]
    %v105 = vld [vmem:[#allocation3 + $0xa0] sm:$0xff]
    %v106 = vld [vmem:[#allocation3 + $0xa8] sm:$0xff]
    %v107 = vld [vmem:[#allocation3 + $0xb0] sm:$0xff]
    %v108 = vld [vmem:[#allocation3 + $0xb8] sm:$0xff]
    %v109 = vld [vmem:[#allocation3 + $0xc0] sm:$0xff]
    %v110 = vld [vmem:[#allocation3 + $0xc8] sm:$0xff]
    %v111 = vld [vmem:[#allocation3 + $0xd0] sm:$0xff]
    %v112 = vld [vmem:[#allocation3 + $0xd8] sm:$0xff]
    %v113 = vld [vmem:[#allocation3 + $0xe0] sm:$0xff]
    %v114 = vld [vmem:[#allocation3 + $0xe8] sm:$0xff]
    %v115 = vld [vmem:[#allocation3 + $0xf0] sm:$0xff]
    %v116 = vld [vmem:[#allocation3 + $0xf8] sm:$0xff]
    %v117 = vld [vmem:[#allocation3 + $0x100] sm:$0xff]
    %v118 = vld [vmem:[#allocation3 + $0x108] sm:$0xff]
    %v119 = vld [vmem:[#allocation3 + $0x110] sm:$0xff]
    %v120 = vld [vmem:[#allocation3 + $0x118] sm:$0xff]
    %v121 = vld [vmem:[#allocation3 + $0x120] sm:$0xff]
    %v122 = vld [vmem:[#allocation3 + $0x128] sm:$0xff]
    %v123 = vld [vmem:[#allocation3 + $0x130] sm:$0xff]
    %v124 = vld [vmem:[#allocation3 + $0x138] sm:$0xff]
    %v125 = vld [vmem:[#allocation3 + $0x140] sm:$0xff]
    %v126 = vld [vmem:[#allocation3 + $0x148] sm:$0xff]
    %v127 = vld [vmem:[#allocation3 + $0x150] sm:$0xff]
    %v128 = vld [vmem:[#allocation3 + $0x158] sm:$0xff]
    %v129 = vld [vmem:[#allocation3 + $0x160] sm:$0xff]
    %v130 = vld [vmem:[#allocation3 + $0x168] sm:$0xff]
    %v131 = vld [vmem:[#allocation3 + $0x170] sm:$0xff]
    %v132 = vld [vmem:[#allocation3 + $0x178] sm:$0xff]
    %v133 = vld [vmem:[#allocation3 + $0x180] sm:$0x3]
    %v134 = vld [vmem:[#allocation3 + $0x188] sm:$0x3]
    %v135 = vld [vmem:[#allocation3 + $0x190] sm:$0x3]
    %v136 = vld [vmem:[#allocation3 + $0x198] sm:$0x3]
    %v137 = vld [vmem:[#allocation6] sm:$0xff]
    %v138 = vld [vmem:[#allocation8] sm:$0xff]
    %v139 = vld [vmem:[#allocation8 + $0x8] sm:$0xff]
    %v140 = vld [vmem:[#allocation8 + $0x10] sm:$0xff]
    %v141 = vld [vmem:[#allocation8 + $0x18] sm:$0xff]
    %v142 = vld [vmem:[#allocation8 + $0x20] sm:$0xff]
    %v143 = vld [vmem:[#allocation8 + $0x28] sm:$0xff]
    %v144 = vld [vmem:[#allocation8 + $0x30] sm:$0xff]
    %v145 = vld [vmem:[#allocation8 + $0x38] sm:$0xff]
    %v146 = vld [vmem:[#allocation8 + $0x40] sm:$0xff]
    %v147 = vld [vmem:[#allocation8 + $0x48] sm:$0xff]
    %v148 = vld [vmem:[#allocation8 + $0x50] sm:$0xff]
    %v149 = vld [vmem:[#allocation8 + $0x58] sm:$0xff]
    %v150 = vld [vmem:[#allocation8 + $0x60] sm:$0xff]
    %v151 = vld [vmem:[#allocation8 + $0x68] sm:$0xff]
    %v152 = vld [vmem:[#allocation8 + $0x70] sm:$0xff]
    %v153 = vld [vmem:[#allocation8 + $0x78] sm:$0xff]
    %v154 = vld [vmem:[#allocation8 + $0x80] sm:$0xff]
    %v155 = vld [vmem:[#allocation8 + $0x88] sm:$0xff]
    %v156 = vld [vmem:[#allocation8 + $0x90] sm:$0xff]
    %v157 = vld [vmem:[#allocation8 + $0x98] sm:$0xff]
    %v158 = vld [vmem:[#allocation8 + $0xa0] sm:$0xff]
    %v159 = vld [vmem:[#allocation8 + $0xa8] sm:$0xff]
    %v160 = vld [vmem:[#allocation8 + $0xb0] sm:$0xff]
    %v161 = vld [vmem:[#allocation8 + $0xb8] sm:$0xff]
    %v162 = vld [vmem:[#allocation8 + $0xc0] sm:$0xff]
    %v163 = vld [vmem:[#allocation8 + $0xc8] sm:$0xff]
    %v164 = vld [vmem:[#allocation8 + $0xd0] sm:$0xff]
    %v165 = vld [vmem:[#allocation8 + $0xd8] sm:$0xff]
    %v166 = vld [vmem:[#allocation8 + $0xe0] sm:$0xff]
    %v167 = vld [vmem:[#allocation8 + $0xe8] sm:$0xff]
    %v168 = vld [vmem:[#allocation8 + $0xf0] sm:$0xff]
    %v169 = vld [vmem:[#allocation8 + $0xf8] sm:$0xff]
    %v170 = vld [vmem:[#allocation8 + $0x100] sm:$0xff]
    %v171 = vld [vmem:[#allocation8 + $0x108] sm:$0xff]
    %v172 = vld [vmem:[#allocation8 + $0x110] sm:$0xff]
    %v173 = vld [vmem:[#allocation8 + $0x118] sm:$0xff]
    %v174 = vld [vmem:[#allocation8 + $0x120] sm:$0xff]
    %v175 = vld [vmem:[#allocation8 + $0x128] sm:$0xff]
    %v176 = vld [vmem:[#allocation8 + $0x130] sm:$0xff]
    %v177 = vld [vmem:[#allocation8 + $0x138] sm:$0xff]
    %v178 = vld [vmem:[#allocation8 + $0x140] sm:$0xff]
    %v179 = vld [vmem:[#allocation8 + $0x148] sm:$0xff]
    %v180 = vld [vmem:[#allocation8 + $0x150] sm:$0xff]
    %v181 = vld [vmem:[#allocation8 + $0x158] sm:$0xff]
    %v182 = vld [vmem:[#allocation8 + $0x160] sm:$0xff]
    %v183 = vld [vmem:[#allocation8 + $0x168] sm:$0xff]
    %v184 = vld [vmem:[#allocation8 + $0x170] sm:$0xff]
    %v185 = vld [vmem:[#allocation8 + $0x178] sm:$0xff]
    %v186 = vld [vmem:[#allocation8 + $0x180] sm:$0xff]
    %v187 = vld [vmem:[#allocation8 + $0x188] sm:$0xff]
    %v188 = vld [vmem:[#allocation8 + $0x190] sm:$0xff]
    %v189 = vld [vmem:[#allocation8 + $0x198] sm:$0xff]
    %v190 = vld [vmem:[#allocation8 + $0x1a0] sm:$0xff]
    %v191 = vld [vmem:[#allocation8 + $0x1a8] sm:$0xff]
    %v192 = vld [vmem:[#allocation8 + $0x1b0] sm:$0xff]
    %v193 = vld [vmem:[#allocation8 + $0x1b8] sm:$0xff]
    %v194 = vld [vmem:[#allocation8 + $0x1c0] sm:$0xff]
    %v195 = vld [vmem:[#allocation8 + $0x1c8] sm:$0xff]
    %v196 = vld [vmem:[#allocation8 + $0x1d0] sm:$0xff]
    %v197 = vld [vmem:[#allocation8 + $0x1d8] sm:$0xff]
    %v198 = vld [vmem:[#allocation8 + $0x1e0] sm:$0xff]
    %v199 = vld [vmem:[#allocation8 + $0x1e8] sm:$0xff]
    %v200 = vld [vmem:[#allocation8 + $0x1f0] sm:$0xff]
    %v201 = vld [vmem:[#allocation8 + $0x1f8] sm:$0xff]
    %v202 = vld [vmem:[#allocation8 + $0x200] sm:$0xff]
    %v203 = vld [vmem:[#allocation8 + $0x208] sm:$0xff]
    %v204 = vld [vmem:[#allocation8 + $0x210] sm:$0xff]
    %v205 = vld [vmem:[#allocation8 + $0x218] sm:$0xff]
    %v206 = vld [vmem:[#allocation8 + $0x220] sm:$0xff]
    %v207 = vld [vmem:[#allocation8 + $0x228] sm:$0xff]
    %v208 = vld [vmem:[#allocation8 + $0x230] sm:$0xff]
    %v209 = vld [vmem:[#allocation8 + $0x238] sm:$0xff]
    %v210 = vld [vmem:[#allocation8 + $0x240] sm:$0xff]
    %v211 = vld [vmem:[#allocation8 + $0x248] sm:$0xff]
    %v212 = vld [vmem:[#allocation8 + $0x250] sm:$0xff]
    %v213 = vld [vmem:[#allocation8 + $0x258] sm:$0xff]
    %v214 = vld [vmem:[#allocation8 + $0x260] sm:$0xff]
    %v215 = vld [vmem:[#allocation8 + $0x268] sm:$0xff]
    %v216 = vld [vmem:[#allocation8 + $0x270] sm:$0xff]
    %v217 = vld [vmem:[#allocation8 + $0x278] sm:$0xff]
    %v218 = vld [vmem:[#allocation8 + $0x280] sm:$0xff]
    %v219 = vld [vmem:[#allocation8 + $0x288] sm:$0xff]
    %v220 = vld [vmem:[#allocation8 + $0x290] sm:$0xff]
    %v221 = vld [vmem:[#allocation8 + $0x298] sm:$0xff]
    %v222 = vld [vmem:[#allocation8 + $0x2a0] sm:$0xff]
    %v223 = vld [vmem:[#allocation8 + $0x2a8] sm:$0xff]
    %v224 = vld [vmem:[#allocation8 + $0x2b0] sm:$0xff]
    %v225 = vld [vmem:[#allocation8 + $0x2b8] sm:$0xff]
    %v226 = vld [vmem:[#allocation8 + $0x2c0] sm:$0xff]
    %v227 = vld [vmem:[#allocation8 + $0x2c8] sm:$0xff]
    %v228 = vld [vmem:[#allocation8 + $0x2d0] sm:$0xff]
    %v229 = vld [vmem:[#allocation8 + $0x2d8] sm:$0xff]
    %v230 = vld [vmem:[#allocation8 + $0x2e0] sm:$0xff]
    %v231 = vld [vmem:[#allocation8 + $0x2e8] sm:$0xff]
    %v232 = vld [vmem:[#allocation8 + $0x2f0] sm:$0xff]
    %v233 = vld [vmem:[#allocation8 + $0x2f8] sm:$0xff]
    %v234 = vld [vmem:[#allocation8 + $0x300] sm:$0xff]
    %v235 = vld [vmem:[#allocation8 + $0x308] sm:$0xff]
    %v236 = vld [vmem:[#allocation8 + $0x310] sm:$0xff]
    %v237 = vld [vmem:[#allocation8 + $0x318] sm:$0xff]
    %v238 = vld [vmem:[#allocation8 + $0x320] sm:$0xff]
    %v239 = vld [vmem:[#allocation8 + $0x328] sm:$0xff]
    %v240 = vld [vmem:[#allocation8 + $0x330] sm:$0xff]
    %v241 = vld [vmem:[#allocation8 + $0x338] sm:$0xff]
    %v242 = vld [vmem:[#allocation8 + $0x340] sm:$0xff]
    %v243 = vld [vmem:[#allocation8 + $0x348] sm:$0xff]
    %v244 = vld [vmem:[#allocation8 + $0x350] sm:$0xff]
    %v245 = vld [vmem:[#allocation8 + $0x358] sm:$0xff]
    %v246 = vld [vmem:[#allocation8 + $0x360] sm:$0xff]
    %v247 = vld [vmem:[#allocation8 + $0x368] sm:$0xff]
    %v248 = vld [vmem:[#allocation8 + $0x370] sm:$0xff]
    %v249 = vld [vmem:[#allocation8 + $0x378] sm:$0xff]
    %v250 = vld [vmem:[#allocation8 + $0x380] sm:$0xff]
    %v251 = vld [vmem:[#allocation8 + $0x388] sm:$0xff]
    %v252 = vld [vmem:[#allocation8 + $0x390] sm:$0xff]
    %v253 = vld [vmem:[#allocation8 + $0x398] sm:$0xff]
    %v254 = vld [vmem:[#allocation8 + $0x3a0] sm:$0xff]
    %v255 = vld [vmem:[#allocation8 + $0x3a8] sm:$0xff]
    %v256 = vld [vmem:[#allocation8 + $0x3b0] sm:$0xff]
    %v257 = vld [vmem:[#allocation8 + $0x3b8] sm:$0xff]
    %v258 = vld [vmem:[#allocation8 + $0x3c0] sm:$0xff]
    %v259 = vld [vmem:[#allocation8 + $0x3c8] sm:$0xff]
    %v260 = vld [vmem:[#allocation8 + $0x3d0] sm:$0xff]
    %v261 = vld [vmem:[#allocation8 + $0x3d8] sm:$0xff]
    %v262 = vld [vmem:[#allocation8 + $0x3e0] sm:$0xff]
    %v263 = vld [vmem:[#allocation8 + $0x3e8] sm:$0xff]
    %v264 = vld [vmem:[#allocation8 + $0x3f0] sm:$0xff]
    %v265 = vld [vmem:[#allocation8 + $0x3f8] sm:$0xff]
    %v266 = vld [vmem:[#allocation8 + $0x400] sm:$0xff]
    %v267 = vld [vmem:[#allocation8 + $0x408] sm:$0xff]
    %v268 = vld [vmem:[#allocation8 + $0x410] sm:$0xff]
    %v269 = vld [vmem:[#allocation8 + $0x418] sm:$0xff]
    %v270 = vld [vmem:[#allocation8 + $0x420] sm:$0xff]
    %v271 = vld [vmem:[#allocation8 + $0x428] sm:$0xff]
    %v272 = vld [vmem:[#allocation8 + $0x430] sm:$0xff]
    %v273 = vld [vmem:[#allocation8 + $0x438] sm:$0xff]
    %v274 = vld [vmem:[#allocation8 + $0x440] sm:$0xff]
    %v275 = vld [vmem:[#allocation8 + $0x448] sm:$0xff]
    %v276 = vld [vmem:[#allocation8 + $0x450] sm:$0xff]
    %v277 = vld [vmem:[#allocation8 + $0x458] sm:$0xff]
    %v278 = vld [vmem:[#allocation8 + $0x460] sm:$0xff]
    %v279 = vld [vmem:[#allocation8 + $0x468] sm:$0xff]
    %v280 = vld [vmem:[#allocation8 + $0x470] sm:$0xff]
    %v281 = vld [vmem:[#allocation8 + $0x478] sm:$0xff]
    %v282 = vld [vmem:[#allocation8 + $0x480] sm:$0xff]
    %v283 = vld [vmem:[#allocation8 + $0x488] sm:$0xff]
    %v284 = vld [vmem:[#allocation8 + $0x490] sm:$0xff]
    %v285 = vld [vmem:[#allocation8 + $0x498] sm:$0xff]
    %v286 = vld [vmem:[#allocation8 + $0x4a0] sm:$0xff]
    %v287 = vld [vmem:[#allocation8 + $0x4a8] sm:$0xff]
    %v288 = vld [vmem:[#allocation8 + $0x4b0] sm:$0xff]
    %v289 = vld [vmem:[#allocation8 + $0x4b8] sm:$0xff]
    %v290 = vld [vmem:[#allocation8 + $0x4c0] sm:$0xff]
    %v291 = vld [vmem:[#allocation8 + $0x4c8] sm:$0xff]
    %v292 = vld [vmem:[#allocation8 + $0x4d0] sm:$0xff]
    %v293 = vld [vmem:[#allocation8 + $0x4d8] sm:$0xff]
    %v294 = vld [vmem:[#allocation8 + $0x4e0] sm:$0xff]
    %v295 = vld [vmem:[#allocation8 + $0x4e8] sm:$0xff]
    %v296 = vld [vmem:[#allocation8 + $0x4f0] sm:$0xff]
    %v297 = vld [vmem:[#allocation8 + $0x4f8] sm:$0xff]
    %v298 = vld [vmem:[#allocation8 + $0x500] sm:$0xff]
    %v299 = vld [vmem:[#allocation8 + $0x508] sm:$0xff]
    %v300 = vld [vmem:[#allocation8 + $0x510] sm:$0xff]
    %v301 = vld [vmem:[#allocation8 + $0x518] sm:$0xff]
    %v302 = vld [vmem:[#allocation8 + $0x520] sm:$0xff]
    %v303 = vld [vmem:[#allocation8 + $0x528] sm:$0xff]
    %v304 = vld [vmem:[#allocation8 + $0x530] sm:$0xff]
    %v305 = vld [vmem:[#allocation8 + $0x538] sm:$0xff]
    %v306 = vld [vmem:[#allocation8 + $0x540] sm:$0xff]
    %v307 = vld [vmem:[#allocation8 + $0x548] sm:$0xff]
    %v308 = vld [vmem:[#allocation8 + $0x550] sm:$0xff]
    %v309 = vld [vmem:[#allocation8 + $0x558] sm:$0xff]
    %v310 = vld [vmem:[#allocation8 + $0x560] sm:$0xff]
    %v311 = vld [vmem:[#allocation8 + $0x568] sm:$0xff]
    %v312 = vld [vmem:[#allocation8 + $0x570] sm:$0xff]
    %v313 = vld [vmem:[#allocation8 + $0x578] sm:$0xff]
    %v314 = vld [vmem:[#allocation8 + $0x580] sm:$0xff]
    %v315 = vld [vmem:[#allocation8 + $0x588] sm:$0xff]
    %v316 = vld [vmem:[#allocation8 + $0x590] sm:$0xff]
    %v317 = vld [vmem:[#allocation8 + $0x598] sm:$0xff]
    %v318 = vld [vmem:[#allocation8 + $0x5a0] sm:$0xff]
    %v319 = vld [vmem:[#allocation8 + $0x5a8] sm:$0xff]
    %v320 = vld [vmem:[#allocation8 + $0x5b0] sm:$0xff]
    %v321 = vld [vmem:[#allocation8 + $0x5b8] sm:$0xff]
    %v322 = vld [vmem:[#allocation8 + $0x5c0] sm:$0xff]
    %v323 = vld [vmem:[#allocation8 + $0x5c8] sm:$0xff]
    %v324 = vld [vmem:[#allocation8 + $0x5d0] sm:$0xff]
    %v325 = vld [vmem:[#allocation8 + $0x5d8] sm:$0xff]
    %v326 = vld [vmem:[#allocation8 + $0x5e0] sm:$0xff]
    %v327 = vld [vmem:[#allocation8 + $0x5e8] sm:$0xff]
    %v328 = vld [vmem:[#allocation8 + $0x5f0] sm:$0xff]
    %v329 = vld [vmem:[#allocation8 + $0x5f8] sm:$0xff]
    %v330 = vld [vmem:[#allocation8 + $0x600] sm:$0xff]
    %v331 = vld [vmem:[#allocation8 + $0x608] sm:$0xff]
    %v332 = vld [vmem:[#allocation8 + $0x610] sm:$0xff]
    %v333 = vld [vmem:[#allocation8 + $0x618] sm:$0xff]
    %v334 = vld [vmem:[#allocation8 + $0x620] sm:$0xff]
    %v335 = vld [vmem:[#allocation8 + $0x628] sm:$0xff]
    %v336 = vld [vmem:[#allocation8 + $0x630] sm:$0xff]
    %v337 = vld [vmem:[#allocation8 + $0x638] sm:$0xff]
    %v338 = vld [vmem:[#allocation8 + $0x640] sm:$0xff]
    %v339 = vld [vmem:[#allocation8 + $0x648] sm:$0xff]
    %v340 = vld [vmem:[#allocation8 + $0x650] sm:$0xff]
    %v341 = vld [vmem:[#allocation8 + $0x658] sm:$0xff]
    %v342 = vld [vmem:[#allocation8 + $0x660] sm:$0xff]
    %v343 = vld [vmem:[#allocation8 + $0x668] sm:$0xff]
    %v344 = vld [vmem:[#allocation8 + $0x670] sm:$0xff]
    %v345 = vld [vmem:[#allocation8 + $0x678] sm:$0xff]
    %v346 = vld [vmem:[#allocation8 + $0x680] sm:$0xff]
    %v347 = vld [vmem:[#allocation8 + $0x688] sm:$0xff]
    %v348 = vld [vmem:[#allocation8 + $0x690] sm:$0xff]
    %v349 = vld [vmem:[#allocation8 + $0x698] sm:$0xff]
    %v350 = vld [vmem:[#allocation8 + $0x6a0] sm:$0xff]
    %v351 = vld [vmem:[#allocation8 + $0x6a8] sm:$0xff]
    %v352 = vld [vmem:[#allocation8 + $0x6b0] sm:$0xff]
    %v353 = vld [vmem:[#allocation8 + $0x6b8] sm:$0xff]
    %v354 = vld [vmem:[#allocation8 + $0x6c0] sm:$0xff]
    %v355 = vld [vmem:[#allocation8 + $0x6c8] sm:$0xff]
    %v356 = vld [vmem:[#allocation8 + $0x6d0] sm:$0xff]
    %v357 = vld [vmem:[#allocation8 + $0x6d8] sm:$0xff]
    %v358 = vld [vmem:[#allocation8 + $0x6e0] sm:$0xff]
    %v359 = vld [vmem:[#allocation8 + $0x6e8] sm:$0xff]
    %v360 = vld [vmem:[#allocation8 + $0x6f0] sm:$0xff]
    %v361 = vld [vmem:[#allocation8 + $0x6f8] sm:$0xff]
    %v362 = vld [vmem:[#allocation8 + $0x700] sm:$0xff]
    %v363 = vld [vmem:[#allocation8 + $0x708] sm:$0xff]
    %v364 = vld [vmem:[#allocation8 + $0x710] sm:$0xff]
    %v365 = vld [vmem:[#allocation8 + $0x718] sm:$0xff]
    %v366 = vld [vmem:[#allocation8 + $0x720] sm:$0xff]
    %v367 = vld [vmem:[#allocation8 + $0x728] sm:$0xff]
    %v368 = vld [vmem:[#allocation8 + $0x730] sm:$0xff]
    %v369 = vld [vmem:[#allocation8 + $0x738] sm:$0xff]
    %v370 = vld [vmem:[#allocation8 + $0x740] sm:$0xff]
    %v371 = vld [vmem:[#allocation8 + $0x748] sm:$0xff]
    %v372 = vld [vmem:[#allocation8 + $0x750] sm:$0xff]
    %v373 = vld [vmem:[#allocation8 + $0x758] sm:$0xff]
    %v374 = vld [vmem:[#allocation8 + $0x760] sm:$0xff]
    %v375 = vld [vmem:[#allocation8 + $0x768] sm:$0xff]
    %v376 = vld [vmem:[#allocation8 + $0x770] sm:$0xff]
    %v377 = vld [vmem:[#allocation8 + $0x778] sm:$0xff]
    %v378 = vld [vmem:[#allocation8 + $0x780] sm:$0xff]
    %v379 = vld [vmem:[#allocation8 + $0x788] sm:$0xff]
    %v380 = vld [vmem:[#allocation8 + $0x790] sm:$0xff]
    %v381 = vld [vmem:[#allocation8 + $0x798] sm:$0xff]
    %v382 = vld [vmem:[#allocation8 + $0x7a0] sm:$0xff]
    %v383 = vld [vmem:[#allocation8 + $0x7a8] sm:$0xff]
    %v384 = vld [vmem:[#allocation8 + $0x7b0] sm:$0xff]
    %v385 = vld [vmem:[#allocation8 + $0x7b8] sm:$0xff]
    %v386 = vld [vmem:[#allocation8 + $0x7c0] sm:$0xff]
    %v387 = vld [vmem:[#allocation8 + $0x7c8] sm:$0xff]
    %v388 = vld [vmem:[#allocation8 + $0x7d0] sm:$0xff]
    %v389 = vld [vmem:[#allocation8 + $0x7d8] sm:$0xff]
    %v390 = vld [vmem:[#allocation8 + $0x7e0] sm:$0xff]
    %v391 = vld [vmem:[#allocation8 + $0x7e8] sm:$0xff]
    %v392 = vld [vmem:[#allocation8 + $0x7f0] sm:$0xff]
    %v393 = vld [vmem:[#allocation8 + $0x7f8] sm:$0xff]
    %v394 = vld [vmem:[%s3] sm:$0xf]
    %v396 = vlaneseq
    %v397 = vshrl.u32 %v396, 7
    %v398 = vsub.s32 0, %v397
    %v399 = vrot.slane %v394, %v398
    %v400 = vlaneseq
    %v401 = vshrl.u32 %v400, 7
    %v402 = vsub.s32 1, %v401
    %v403 = vrot.slane %v394, %v402
    %v404 = vlaneseq
    %v405 = vshrl.u32 %v404, 7
    %v406 = vsub.s32 2, %v405
    %v407 = vrot.slane %v394, %v406
    %v408 = vlaneseq
    %v409 = vshrl.u32 %v408, 7
    %v410 = vsub.s32 3, %v409
    %v411 = vrot.slane %v394, %v410
    %416 = vmatprep.subr.mxu0 %v139
    %417 = vmatpush1.msra.mxu0 %v138
    %418 = vmatprep.subr.mxu0 %v143
    %419 = vmatpush1.msra.mxu0 %v142
    %420 = vmatprep.subr.mxu0 %v147
    %421 = vmatpush1.msra.mxu0 %v146
    %422 = vmatprep.subr.mxu0 %v151
    %423 = vmatpush1.msra.mxu0 %v150
    %424 = vmatprep.subr.mxu0 %v155
    %425 = vmatpush1.msra.mxu0 %v154
    %426 = vmatprep.subr.mxu0 %v159
    %427 = vmatpush1.msra.mxu0 %v158
    %428 = vmatprep.subr.mxu0 %v163
    %429 = vmatpush1.msra.mxu0 %v162
    %430 = vmatprep.subr.mxu0 %v167
    %431 = vmatpush1.msra.mxu0 %v166
    %432 = vmatprep.subr.mxu0 %v171
    %433 = vmatpush1.msra.mxu0 %v170
    %434 = vmatprep.subr.mxu0 %v175
    %435 = vmatpush1.msra.mxu0 %v174
    %436 = vmatprep.subr.mxu0 %v179
    %437 = vmatpush1.msra.mxu0 %v178
    %438 = vmatprep.subr.mxu0 %v183
    %439 = vmatpush1.msra.mxu0 %v182
    %440 = vmatprep.subr.mxu0 %v187
    %441 = vmatpush1.msra.mxu0 %v186
    %442 = vmatprep.subr.mxu0 %v191
    %443 = vmatpush1.msra.mxu0 %v190
    %444 = vmatprep.subr.mxu0 %v195
    %445 = vmatpush1.msra.mxu0 %v194
    %446 = vmatprep.subr.mxu0 %v199
    %447 = vmatpush1.msra.mxu0 %v198
    %448 = vmatprep.subr.mxu0 %v203
    %449 = vmatpush1.msra.mxu0 %v202
    %450 = vmatprep.subr.mxu0 %v207
    %451 = vmatpush1.msra.mxu0 %v206
    %452 = vmatprep.subr.mxu0 %v211
    %453 = vmatpush1.msra.mxu0 %v210
    %454 = vmatprep.subr.mxu0 %v215
    %455 = vmatpush1.msra.mxu0 %v214
    %456 = vmatprep.subr.mxu0 %v219
    %457 = vmatpush1.msra.mxu0 %v218
    %458 = vmatprep.subr.mxu0 %v223
    %459 = vmatpush1.msra.mxu0 %v222
    %460 = vmatprep.subr.mxu0 %v227
    %461 = vmatpush1.msra.mxu0 %v226
    %462 = vmatprep.subr.mxu0 %v231
    %463 = vmatpush1.msra.mxu0 %v230
    %464 = vmatprep.subr.mxu0 %v235
    %465 = vmatpush1.msra.mxu0 %v234
    %466 = vmatprep.subr.mxu0 %v239
    %467 = vmatpush1.msra.mxu0 %v238
    %468 = vmatprep.subr.mxu0 %v243
    %469 = vmatpush1.msra.mxu0 %v242
    %470 = vmatprep.subr.mxu0 %v247
    %471 = vmatpush1.msra.mxu0 %v246
    %472 = vmatprep.subr.mxu0 %v251
    %473 = vmatpush1.msra.mxu0 %v250
    %474 = vmatprep.subr.mxu0 %v255
    %475 = vmatpush1.msra.mxu0 %v254
    %476 = vmatprep.subr.mxu0 %v259
    %477 = vmatpush1.msra.mxu0 %v258
    %478 = vmatprep.subr.mxu0 %v263
    %479 = vmatpush1.msra.mxu0 %v262
    %480 = vmatprep.mubr.f32.mxu0 %v86
    %481 = vmatmul.mubr.f32.gmra.mrb[0].mxu0 %v85
    %v482 = vpop.f32.mrb[0].mxu0
    %v483 = vadd.f32 %v399, %v482
    %v484 = vpop.f32.mrb[0].mxu0
    %v485 = vadd.f32 %v403, %v484
    %486 = vmatprep.mubr.f32.mxu0 %v90
    %487 = vmatmul.mubr.f32.gmra.mrb[0].mxu0 %v89
    %v488 = vpop.f32.mrb[0].mxu0
    %v489 = vadd.f32 %v399, %v488
    %v490 = vpop.f32.mrb[0].mxu0
    %v491 = vadd.f32 %v403, %v490
    %492 = vmatprep.mubr.f32.mxu0 %v94
    %493 = vmatmul.mubr.f32.gmra.mrb[0].mxu0 %v93
    %v494 = vpop.f32.mrb[0].mxu0
    %v495 = vadd.f32 %v399, %v494
    %v496 = vpop.f32.mrb[0].mxu0
    %v497 = vadd.f32 %v403, %v496
    %498 = vmatprep.mubr.f32.mxu0 %v98
    %499 = vmatmul.mubr.f32.gmra.mrb[0].mxu0 %v97
    %v500 = vpop.f32.mrb[0].mxu0
    %v501 = vadd.f32 %v399, %v500
    %v502 = vpop.f32.mrb[0].mxu0
    %v503 = vadd.f32 %v403, %v502
    %504 = vmatprep.mubr.f32.mxu0 %v102
    %505 = vmatmul.mubr.f32.gmra.mrb[0].mxu0 %v101
    %v506 = vpop.f32.mrb[0].mxu0
    %v507 = vadd.f32 %v399, %v506
    %v508 = vpop.f32.mrb[0].mxu0
    %v509 = vadd.f32 %v403, %v508
    %510 = vmatprep.mubr.f32.mxu0 %v106
    %511 = vmatmul.mubr.f32.gmra.mrb[0].mxu0 %v105
    %v512 = vpop.f32.mrb[0].mxu0
    %v513 = vadd.f32 %v399, %v512
    %v514 = vpop.f32.mrb[0].mxu0
    %v515 = vadd.f32 %v403, %v514
    %516 = vmatprep.mubr.f32.mxu0 %v110
    %517 = vmatmul.mubr.f32.gmra.mrb[0].mxu0 %v109
    %v518 = vpop.f32.mrb[0].mxu0
    %v519 = vadd.f32 %v399, %v518
    %v520 = vpop.f32.mrb[0].mxu0
    %v521 = vadd.f32 %v403, %v520
    %522 = vmatprep.mubr.f32.mxu0 %v114
    %523 = vmatmul.mubr.f32.gmra.mrb[0].mxu0 %v113
    %v524 = vpop.f32.mrb[0].mxu0
    %v525 = vadd.f32 %v399, %v524
    %v526 = vpop.f32.mrb[0].mxu0
    %v527 = vadd.f32 %v403, %v526
    %528 = vmatprep.mubr.f32.mxu0 %v118
    %529 = vmatmul.mubr.f32.gmra.mrb[0].mxu0 %v117
    %v530 = vpop.f32.mrb[0].mxu0
    %v531 = vadd.f32 %v399, %v530
    %v532 = vpop.f32.mrb[0].mxu0
    %v533 = vadd.f32 %v403, %v532
    %534 = vmatprep.mubr.f32.mxu0 %v122
    %535 = vmatmul.mubr.f32.gmra.mrb[0].mxu0 %v121
    %v536 = vpop.f32.mrb[0].mxu0
    %v537 = vadd.f32 %v399, %v536
    %v538 = vpop.f32.mrb[0].mxu0
    %v539 = vadd.f32 %v403, %v538
    %540 = vmatprep.mubr.f32.mxu0 %v126
    %541 = vmatmul.mubr.f32.gmra.mrb[0].mxu0 %v125
    %v542 = vpop.f32.mrb[0].mxu0
    %v543 = vadd.f32 %v399, %v542
    %v544 = vpop.f32.mrb[0].mxu0
    %v545 = vadd.f32 %v403, %v544
    %546 = vmatprep.mubr.f32.mxu0 %v130
    %547 = vmatmul.mubr.f32.gmra.mrb[0].mxu0 %v129
    %v548 = vpop.f32.mrb[0].mxu0
    %v549 = vadd.f32 %v399, %v548
    %v550 = vpop.f32.mrb[0].mxu0
    %v551 = vadd.f32 %v403, %v550
    %552 = vmatprep.mubr.f32.mxu0 %v134
    %553 = vmatmul.mubr.f32.gmra.mrb[0].mxu0 %v133
    %v554 = vpop.f32.mrb[0].mxu0
    %v555 = vadd.f32 %v399, %v554
    %v556 = vpop.f32.mrb[0].mxu0
    %v557 = vadd.f32 %v403, %v556
    %558 = vdwg.mxu0
    %559 = vmatprep.subr.mxu0 %v267
    %560 = vmatpush1.msra.mxu0 %v266
    %561 = vmatprep.subr.mxu0 %v271
    %562 = vmatpush1.msra.mxu0 %v270
    %563 = vmatprep.subr.mxu0 %v275
    %564 = vmatpush1.msra.mxu0 %v274
    %565 = vmatprep.subr.mxu0 %v279
    %566 = vmatpush1.msra.mxu0 %v278
    %567 = vmatprep.subr.mxu0 %v283
    %568 = vmatpush1.msra.mxu0 %v282
    %569 = vmatprep.subr.mxu0 %v287
    %570 = vmatpush1.msra.mxu0 %v286
    %571 = vmatprep.subr.mxu0 %v291
    %572 = vmatpush1.msra.mxu0 %v290
    %573 = vmatprep.subr.mxu0 %v295
    %574 = vmatpush1.msra.mxu0 %v294
    %575 = vmatprep.subr.mxu0 %v299
    %576 = vmatpush1.msra.mxu0 %v298
    %577 = vmatprep.subr.mxu0 %v303
    %578 = vmatpush1.msra.mxu0 %v302
    %579 = vmatprep.subr.mxu0 %v307
    %580 = vmatpush1.msra.mxu0 %v306
    %581 = vmatprep.subr.mxu0 %v311
    %582 = vmatpush1.msra.mxu0 %v310
    %583 = vmatprep.subr.mxu0 %v315
    %584 = vmatpush1.msra.mxu0 %v314
    %585 = vmatprep.subr.mxu0 %v319
    %586 = vmatpush1.msra.mxu0 %v318
    %587 = vmatprep.subr.mxu0 %v323
    %588 = vmatpush1.msra.mxu0 %v322
    %589 = vmatprep.subr.mxu0 %v327
    %590 = vmatpush1.msra.mxu0 %v326
    %591 = vmatprep.subr.mxu0 %v331
    %592 = vmatpush1.msra.mxu0 %v330
    %593 = vmatprep.subr.mxu0 %v335
    %594 = vmatpush1.msra.mxu0 %v334
    %595 = vmatprep.subr.mxu0 %v339
    %596 = vmatpush1.msra.mxu0 %v338
    %597 = vmatprep.subr.mxu0 %v343
    %598 = vmatpush1.msra.mxu0 %v342
    %599 = vmatprep.subr.mxu0 %v347
    %600 = vmatpush1.msra.mxu0 %v346
    %601 = vmatprep.subr.mxu0 %v351
    %602 = vmatpush1.msra.mxu0 %v350
    %603 = vmatprep.subr.mxu0 %v355
    %604 = vmatpush1.msra.mxu0 %v354
    %605 = vmatprep.subr.mxu0 %v359
    %606 = vmatpush1.msra.mxu0 %v358
    %607 = vmatprep.subr.mxu0 %v363
    %608 = vmatpush1.msra.mxu0 %v362
    %609 = vmatprep.subr.mxu0 %v367
    %610 = vmatpush1.msra.mxu0 %v366
    %611 = vmatprep.subr.mxu0 %v371
    %612 = vmatpush1.msra.mxu0 %v370
    %613 = vmatprep.subr.mxu0 %v375
    %614 = vmatpush1.msra.mxu0 %v374
    %615 = vmatprep.subr.mxu0 %v379
    %616 = vmatpush1.msra.mxu0 %v378
    %617 = vmatprep.subr.mxu0 %v383
    %618 = vmatpush1.msra.mxu0 %v382
    %619 = vmatprep.subr.mxu0 %v387
    %620 = vmatpush1.msra.mxu0 %v386
    %621 = vmatprep.subr.mxu0 %v391
    %622 = vmatpush1.msra.mxu0 %v390
    %623 = vmatprep.mubr.f32.mxu0 %v88
    %624 = vmatmul.mubr.f32.gmra.mrb[0].mxu0 %v87
    %v625 = vpop.f32.mrb[0].mxu0
    %v626 = vadd.f32 %v483, %v625
    %v627 = vpop.f32.mrb[0].mxu0
    %v628 = vadd.f32 %v485, %v627
    %629 = vmatprep.mubr.f32.mxu0 %v92
    %630 = vmatmul.mubr.f32.gmra.mrb[0].mxu0 %v91
    %v631 = vpop.f32.mrb[0].mxu0
    %v632 = vadd.f32 %v489, %v631
    %v633 = vpop.f32.mrb[0].mxu0
    %v634 = vadd.f32 %v491, %v633
    %635 = vmatprep.mubr.f32.mxu0 %v96
    %636 = vmatmul.mubr.f32.gmra.mrb[0].mxu0 %v95
    %v637 = vpop.f32.mrb[0].mxu0
    %v638 = vadd.f32 %v495, %v637
    %v639 = vpop.f32.mrb[0].mxu0
    %v640 = vadd.f32 %v497, %v639
    %641 = vmatprep.mubr.f32.mxu0 %v100
    %642 = vmatmul.mubr.f32.gmra.mrb[0].mxu0 %v99
    %v643 = vpop.f32.mrb[0].mxu0
    %v644 = vadd.f32 %v501, %v643
    %v645 = vpop.f32.mrb[0].mxu0
    %v646 = vadd.f32 %v503, %v645
    %647 = vmatprep.mubr.f32.mxu0 %v104
    %648 = vmatmul.mubr.f32.gmra.mrb[0].mxu0 %v103
    %v649 = vpop.f32.mrb[0].mxu0
    %v650 = vadd.f32 %v507, %v649
    %v651 = vpop.f32.mrb[0].mxu0
    %v652 = vadd.f32 %v509, %v651
    %653 = vmatprep.mubr.f32.mxu0 %v108
    %654 = vmatmul.mubr.f32.gmra.mrb[0].mxu0 %v107
    %v655 = vpop.f32.mrb[0].mxu0
    %v656 = vadd.f32 %v513, %v655
    %v657 = vpop.f32.mrb[0].mxu0
    %v658 = vadd.f32 %v515, %v657
    %659 = vmatprep.mubr.f32.mxu0 %v112
    %660 = vmatmul.mubr.f32.gmra.mrb[0].mxu0 %v111
    %v661 = vpop.f32.mrb[0].mxu0
    %v662 = vadd.f32 %v519, %v661
    %v663 = vpop.f32.mrb[0].mxu0
    %v664 = vadd.f32 %v521, %v663
    %665 = vmatprep.mubr.f32.mxu0 %v116
    %666 = vmatmul.mubr.f32.gmra.mrb[0].mxu0 %v115
    %v667 = vpop.f32.mrb[0].mxu0
    %v668 = vadd.f32 %v525, %v667
    %v669 = vpop.f32.mrb[0].mxu0
    %v670 = vadd.f32 %v527, %v669
    %671 = vmatprep.mubr.f32.mxu0 %v120
    %672 = vmatmul.mubr.f32.gmra.mrb[0].mxu0 %v119
    %v673 = vpop.f32.mrb[0].mxu0
    %v674 = vadd.f32 %v531, %v673
    %v675 = vpop.f32.mrb[0].mxu0
    %v676 = vadd.f32 %v533, %v675
    %677 = vmatprep.mubr.f32.mxu0 %v124
    %678 = vmatmul.mubr.f32.gmra.mrb[0].mxu0 %v123
    %v679 = vpop.f32.mrb[0].mxu0
    %v680 = vadd.f32 %v537, %v679
    %v681 = vpop.f32.mrb[0].mxu0
    %v682 = vadd.f32 %v539, %v681
    %683 = vmatprep.mubr.f32.mxu0 %v128
    %684 = vmatmul.mubr.f32.gmra.mrb[0].mxu0 %v127
    %v685 = vpop.f32.mrb[0].mxu0
    %v686 = vadd.f32 %v543, %v685
    %v687 = vpop.f32.mrb[0].mxu0
    %v688 = vadd.f32 %v545, %v687
    %689 = vmatprep.mubr.f32.mxu0 %v132
    %690 = vmatmul.mubr.f32.gmra.mrb[0].mxu0 %v131
    %v691 = vpop.f32.mrb[0].mxu0
    %v692 = vadd.f32 %v549, %v691
    %v693 = vpop.f32.mrb[0].mxu0
    %v694 = vadd.f32 %v551, %v693
    %695 = vmatprep.mubr.f32.mxu0 %v136
    %696 = vmatmul.mubr.f32.gmra.mrb[0].mxu0 %v135
    %v697 = vpop.f32.mrb[0].mxu0
    %v698 = vadd.f32 %v555, %v697
    %v699 = vpop.f32.mrb[0].mxu0
    %v700 = vadd.f32 %v557, %v699
    %701 = vdwg.mxu0
    %702 = vmatprep.subr.mxu0 %v141
    %703 = vmatpush1.msra.mxu0 %v140
    %704 = vmatprep.subr.mxu0 %v145
    %705 = vmatpush1.msra.mxu0 %v144
    %706 = vmatprep.subr.mxu0 %v149
    %707 = vmatpush1.msra.mxu0 %v148
    %708 = vmatprep.subr.mxu0 %v153
    %709 = vmatpush1.msra.mxu0 %v152
    %710 = vmatprep.subr.mxu0 %v157
    %711 = vmatpush1.msra.mxu0 %v156
    %712 = vmatprep.subr.mxu0 %v161
    %713 = vmatpush1.msra.mxu0 %v160
    %714 = vmatprep.subr.mxu0 %v165
    %715 = vmatpush1.msra.mxu0 %v164
    %716 = vmatprep.subr.mxu0 %v169
    %717 = vmatpush1.msra.mxu0 %v168
    %718 = vmatprep.subr.mxu0 %v173
    %719 = vmatpush1.msra.mxu0 %v172
    %720 = vmatprep.subr.mxu0 %v177
    %721 = vmatpush1.msra.mxu0 %v176
    %722 = vmatprep.subr.mxu0 %v181
    %723 = vmatpush1.msra.mxu0 %v180
    %724 = vmatprep.subr.mxu0 %v185
    %725 = vmatpush1.msra.mxu0 %v184
    %726 = vmatprep.subr.mxu0 %v189
    %727 = vmatpush1.msra.mxu0 %v188
    %728 = vmatprep.subr.mxu0 %v193
    %729 = vmatpush1.msra.mxu0 %v192
    %730 = vmatprep.subr.mxu0 %v197
    %731 = vmatpush1.msra.mxu0 %v196
    %732 = vmatprep.subr.mxu0 %v201
    %733 = vmatpush1.msra.mxu0 %v200
    %734 = vmatprep.subr.mxu0 %v205
    %735 = vmatpush1.msra.mxu0 %v204
    %736 = vmatprep.subr.mxu0 %v209
    %737 = vmatpush1.msra.mxu0 %v208
    %738 = vmatprep.subr.mxu0 %v213
    %739 = vmatpush1.msra.mxu0 %v212
    %740 = vmatprep.subr.mxu0 %v217
    %741 = vmatpush1.msra.mxu0 %v216
    %742 = vmatprep.subr.mxu0 %v221
    %743 = vmatpush1.msra.mxu0 %v220
    %744 = vmatprep.subr.mxu0 %v225
    %745 = vmatpush1.msra.mxu0 %v224
    %746 = vmatprep.subr.mxu0 %v229
    %747 = vmatpush1.msra.mxu0 %v228
    %748 = vmatprep.subr.mxu0 %v233
    %749 = vmatpush1.msra.mxu0 %v232
    %750 = vmatprep.subr.mxu0 %v237
    %751 = vmatpush1.msra.mxu0 %v236
    %752 = vmatprep.subr.mxu0 %v241
    %753 = vmatpush1.msra.mxu0 %v240
    %754 = vmatprep.subr.mxu0 %v245
    %755 = vmatpush1.msra.mxu0 %v244
    %756 = vmatprep.subr.mxu0 %v249
    %757 = vmatpush1.msra.mxu0 %v248
    %758 = vmatprep.subr.mxu0 %v253
    %759 = vmatpush1.msra.mxu0 %v252
    %760 = vmatprep.subr.mxu0 %v257
    %761 = vmatpush1.msra.mxu0 %v256
    %762 = vmatprep.subr.mxu0 %v261
    %763 = vmatpush1.msra.mxu0 %v260
    %764 = vmatprep.subr.mxu0 %v265
    %765 = vmatpush1.msra.mxu0 %v264
    %766 = vmatprep.mubr.f32.mxu0 %v86
    %767 = vmatmul.mubr.f32.gmra.mrb[0].mxu0 %v85
    %v768 = vpop.f32.mrb[0].mxu0
    %v769 = vadd.f32 %v407, %v768
    %v770 = vpop.f32.mrb[0].mxu0
    %v771 = vadd.f32 %v411, %v770
    %772 = vmatprep.mubr.f32.mxu0 %v90
    %773 = vmatmul.mubr.f32.gmra.mrb[0].mxu0 %v89
    %v774 = vpop.f32.mrb[0].mxu0
    %v775 = vadd.f32 %v407, %v774
    %v776 = vpop.f32.mrb[0].mxu0
    %v777 = vadd.f32 %v411, %v776
    %778 = vmatprep.mubr.f32.mxu0 %v94
    %779 = vmatmul.mubr.f32.gmra.mrb[0].mxu0 %v93
    %v780 = vpop.f32.mrb[0].mxu0
    %v781 = vadd.f32 %v407, %v780
    %v782 = vpop.f32.mrb[0].mxu0
    %v783 = vadd.f32 %v411, %v782
    %784 = vmatprep.mubr.f32.mxu0 %v98
    %785 = vmatmul.mubr.f32.gmra.mrb[0].mxu0 %v97
    %v786 = vpop.f32.mrb[0].mxu0
    %v787 = vadd.f32 %v407, %v786
    %v788 = vpop.f32.mrb[0].mxu0
    %v789 = vadd.f32 %v411, %v788
    %790 = vmatprep.mubr.f32.mxu0 %v102
    %791 = vmatmul.mubr.f32.gmra.mrb[0].mxu0 %v101
    %v792 = vpop.f32.mrb[0].mxu0
    %v793 = vadd.f32 %v407, %v792
    %v794 = vpop.f32.mrb[0].mxu0
    %v795 = vadd.f32 %v411, %v794
    %796 = vmatprep.mubr.f32.mxu0 %v106
    %797 = vmatmul.mubr.f32.gmra.mrb[0].mxu0 %v105
    %v798 = vpop.f32.mrb[0].mxu0
    %v799 = vadd.f32 %v407, %v798
    %v800 = vpop.f32.mrb[0].mxu0
    %v801 = vadd.f32 %v411, %v800
    %802 = vmatprep.mubr.f32.mxu0 %v110
    %803 = vmatmul.mubr.f32.gmra.mrb[0].mxu0 %v109
    %v804 = vpop.f32.mrb[0].mxu0
    %v805 = vadd.f32 %v407, %v804
    %v806 = vpop.f32.mrb[0].mxu0
    %v807 = vadd.f32 %v411, %v806
    %808 = vmatprep.mubr.f32.mxu0 %v114
    %809 = vmatmul.mubr.f32.gmra.mrb[0].mxu0 %v113
    %v810 = vpop.f32.mrb[0].mxu0
    %v811 = vadd.f32 %v407, %v810
    %v812 = vpop.f32.mrb[0].mxu0
    %v813 = vadd.f32 %v411, %v812
    %814 = vmatprep.mubr.f32.mxu0 %v118
    %815 = vmatmul.mubr.f32.gmra.mrb[0].mxu0 %v117
    %v816 = vpop.f32.mrb[0].mxu0
    %v817 = vadd.f32 %v407, %v816
    %v818 = vpop.f32.mrb[0].mxu0
    %v819 = vadd.f32 %v411, %v818
    %820 = vmatprep.mubr.f32.mxu0 %v122
    %821 = vmatmul.mubr.f32.gmra.mrb[0].mxu0 %v121
    %v822 = vpop.f32.mrb[0].mxu0
    %v823 = vadd.f32 %v407, %v822
    %v824 = vpop.f32.mrb[0].mxu0
    %v825 = vadd.f32 %v411, %v824
    %826 = vmatprep.mubr.f32.mxu0 %v126
    %827 = vmatmul.mubr.f32.gmra.mrb[0].mxu0 %v125
    %v828 = vpop.f32.mrb[0].mxu0
    %v829 = vadd.f32 %v407, %v828
    %v830 = vpop.f32.mrb[0].mxu0
    %v831 = vadd.f32 %v411, %v830
    %832 = vmatprep.mubr.f32.mxu0 %v130
    %833 = vmatmul.mubr.f32.gmra.mrb[0].mxu0 %v129
    %v834 = vpop.f32.mrb[0].mxu0
    %v835 = vadd.f32 %v407, %v834
    %v836 = vpop.f32.mrb[0].mxu0
    %v837 = vadd.f32 %v411, %v836
    %838 = vmatprep.mubr.f32.mxu0 %v134
    %839 = vmatmul.mubr.f32.gmra.mrb[0].mxu0 %v133
    %v840 = vpop.f32.mrb[0].mxu0
    %v841 = vadd.f32 %v407, %v840
    %v842 = vpop.f32.mrb[0].mxu0
    %v843 = vadd.f32 %v411, %v842
    %844 = vdwg.mxu0
    %845 = vmatprep.subr.mxu0 %v269
    %846 = vmatpush1.msra.mxu0 %v268
    %847 = vmatprep.subr.mxu0 %v273
    %848 = vmatpush1.msra.mxu0 %v272
    %849 = vmatprep.subr.mxu0 %v277
    %850 = vmatpush1.msra.mxu0 %v276
    %851 = vmatprep.subr.mxu0 %v281
    %852 = vmatpush1.msra.mxu0 %v280
    %853 = vmatprep.subr.mxu0 %v285
    %854 = vmatpush1.msra.mxu0 %v284
    %855 = vmatprep.subr.mxu0 %v289
    %856 = vmatpush1.msra.mxu0 %v288
    %857 = vmatprep.subr.mxu0 %v293
    %858 = vmatpush1.msra.mxu0 %v292
    %859 = vmatprep.subr.mxu0 %v297
    %860 = vmatpush1.msra.mxu0 %v296
    %861 = vmatprep.subr.mxu0 %v301
    %862 = vmatpush1.msra.mxu0 %v300
    %863 = vmatprep.subr.mxu0 %v305
    %864 = vmatpush1.msra.mxu0 %v304
    %865 = vmatprep.subr.mxu0 %v309
    %866 = vmatpush1.msra.mxu0 %v308
    %867 = vmatprep.subr.mxu0 %v313
    %868 = vmatpush1.msra.mxu0 %v312
    %869 = vmatprep.subr.mxu0 %v317
    %870 = vmatpush1.msra.mxu0 %v316
    %871 = vmatprep.subr.mxu0 %v321
    %872 = vmatpush1.msra.mxu0 %v320
    %873 = vmatprep.subr.mxu0 %v325
    %874 = vmatpush1.msra.mxu0 %v324
    %875 = vmatprep.subr.mxu0 %v329
    %876 = vmatpush1.msra.mxu0 %v328
    %877 = vmatprep.subr.mxu0 %v333
    %878 = vmatpush1.msra.mxu0 %v332
    %879 = vmatprep.subr.mxu0 %v337
    %880 = vmatpush1.msra.mxu0 %v336
    %881 = vmatprep.subr.mxu0 %v341
    %882 = vmatpush1.msra.mxu0 %v340
    %883 = vmatprep.subr.mxu0 %v345
    %884 = vmatpush1.msra.mxu0 %v344
    %885 = vmatprep.subr.mxu0 %v349
    %886 = vmatpush1.msra.mxu0 %v348
    %887 = vmatprep.subr.mxu0 %v353
    %888 = vmatpush1.msra.mxu0 %v352
    %889 = vmatprep.subr.mxu0 %v357
    %890 = vmatpush1.msra.mxu0 %v356
    %891 = vmatprep.subr.mxu0 %v361
    %892 = vmatpush1.msra.mxu0 %v360
    %893 = vmatprep.subr.mxu0 %v365
    %894 = vmatpush1.msra.mxu0 %v364
    %895 = vmatprep.subr.mxu0 %v369
    %896 = vmatpush1.msra.mxu0 %v368
    %897 = vmatprep.subr.mxu0 %v373
    %898 = vmatpush1.msra.mxu0 %v372
    %899 = vmatprep.subr.mxu0 %v377
    %900 = vmatpush1.msra.mxu0 %v376
    %901 = vmatprep.subr.mxu0 %v381
    %902 = vmatpush1.msra.mxu0 %v380
    %903 = vmatprep.subr.mxu0 %v385
    %904 = vmatpush1.msra.mxu0 %v384
    %905 = vmatprep.subr.mxu0 %v389
    %906 = vmatpush1.msra.mxu0 %v388
    %907 = vmatprep.subr.mxu0 %v393
    %908 = vmatpush1.msra.mxu0 %v392
    %909 = vmatprep.mubr.f32.mxu0 %v88
    %910 = vmatmul.mubr.f32.gmra.mrb[0].mxu0 %v87
    %v911 = vpop.f32.mrb[0].mxu0
    %v912 = vadd.f32 %v769, %v911
    %v913 = vpop.f32.mrb[0].mxu0
    %v914 = vadd.f32 %v771, %v913
    %915 = vmatprep.mubr.f32.mxu0 %v92
    %916 = vmatmul.mubr.f32.gmra.mrb[0].mxu0 %v91
    %v917 = vpop.f32.mrb[0].mxu0
    %v918 = vadd.f32 %v775, %v917
    %v919 = vpop.f32.mrb[0].mxu0
    %v920 = vadd.f32 %v777, %v919
    %921 = vmatprep.mubr.f32.mxu0 %v96
    %922 = vmatmul.mubr.f32.gmra.mrb[0].mxu0 %v95
    %v923 = vpop.f32.mrb[0].mxu0
    %v924 = vadd.f32 %v781, %v923
    %v925 = vpop.f32.mrb[0].mxu0
    %v926 = vadd.f32 %v783, %v925
    %927 = vmatprep.mubr.f32.mxu0 %v100
    %928 = vmatmul.mubr.f32.gmra.mrb[0].mxu0 %v99
    %v929 = vpop.f32.mrb[0].mxu0
    %v930 = vadd.f32 %v787, %v929
    %v931 = vpop.f32.mrb[0].mxu0
    %v932 = vadd.f32 %v789, %v931
    %933 = vmatprep.mubr.f32.mxu0 %v104
    %934 = vmatmul.mubr.f32.gmra.mrb[0].mxu0 %v103
    %v935 = vpop.f32.mrb[0].mxu0
    %v936 = vadd.f32 %v793, %v935
    %v937 = vpop.f32.mrb[0].mxu0
    %v938 = vadd.f32 %v795, %v937
    %939 = vmatprep.mubr.f32.mxu0 %v108
    %940 = vmatmul.mubr.f32.gmra.mrb[0].mxu0 %v107
    %v941 = vpop.f32.mrb[0].mxu0
    %v942 = vadd.f32 %v799, %v941
    %v943 = vpop.f32.mrb[0].mxu0
    %v944 = vadd.f32 %v801, %v943
    %945 = vmatprep.mubr.f32.mxu0 %v112
    %946 = vmatmul.mubr.f32.gmra.mrb[0].mxu0 %v111
    %v947 = vpop.f32.mrb[0].mxu0
    %v948 = vadd.f32 %v805, %v947
    %v949 = vpop.f32.mrb[0].mxu0
    %v950 = vadd.f32 %v807, %v949
    %951 = vmatprep.mubr.f32.mxu0 %v116
    %952 = vmatmul.mubr.f32.gmra.mrb[0].mxu0 %v115
    %v953 = vpop.f32.mrb[0].mxu0
    %v954 = vadd.f32 %v811, %v953
    %v955 = vpop.f32.mrb[0].mxu0
    %v956 = vadd.f32 %v813, %v955
    %957 = vmatprep.mubr.f32.mxu0 %v120
    %958 = vmatmul.mubr.f32.gmra.mrb[0].mxu0 %v119
    %v959 = vpop.f32.mrb[0].mxu0
    %v960 = vadd.f32 %v817, %v959
    %v961 = vpop.f32.mrb[0].mxu0
    %v962 = vadd.f32 %v819, %v961
    %963 = vmatprep.mubr.f32.mxu0 %v124
    %964 = vmatmul.mubr.f32.gmra.mrb[0].mxu0 %v123
    %v965 = vpop.f32.mrb[0].mxu0
    %v966 = vadd.f32 %v823, %v965
    %v967 = vpop.f32.mrb[0].mxu0
    %v968 = vadd.f32 %v825, %v967
    %969 = vmatprep.mubr.f32.mxu0 %v128
    %970 = vmatmul.mubr.f32.gmra.mrb[0].mxu0 %v127
    %v971 = vpop.f32.mrb[0].mxu0
    %v972 = vadd.f32 %v829, %v971
    %v973 = vpop.f32.mrb[0].mxu0
    %v974 = vadd.f32 %v831, %v973
    %975 = vmatprep.mubr.f32.mxu0 %v132
    %976 = vmatmul.mubr.f32.gmra.mrb[0].mxu0 %v131
    %v977 = vpop.f32.mrb[0].mxu0
    %v978 = vadd.f32 %v835, %v977
    %v979 = vpop.f32.mrb[0].mxu0
    %v980 = vadd.f32 %v837, %v979
    %981 = vmatprep.mubr.f32.mxu0 %v136
    %982 = vmatmul.mubr.f32.gmra.mrb[0].mxu0 %v135
    %v983 = vpop.f32.mrb[0].mxu0
    %v984 = vadd.f32 %v841, %v983
    %v985 = vpop.f32.mrb[0].mxu0
    %v986 = vadd.f32 %v843, %v985
    %987 = vdwg.mxu0
    %v988 = vmax.f32 %v626, 0.0
    %v989 = vmax.f32 %v628, 0.0
    %v990 = vmax.f32 %v912, 0.0
    %v991 = vmax.f32 %v914, 0.0
    %v992 = vmax.f32 %v632, 0.0
    %v993 = vmax.f32 %v634, 0.0
    %v994 = vmax.f32 %v918, 0.0
    %v995 = vmax.f32 %v920, 0.0
    %v996 = vmax.f32 %v638, 0.0
    %v997 = vmax.f32 %v640, 0.0
    %v998 = vmax.f32 %v924, 0.0
    %v999 = vmax.f32 %v926, 0.0
    %v1000 = vmax.f32 %v644, 0.0
    %v1001 = vmax.f32 %v646, 0.0
    %v1002 = vmax.f32 %v930, 0.0
    %v1003 = vmax.f32 %v932, 0.0
    %v1004 = vmax.f32 %v650, 0.0
    %v1005 = vmax.f32 %v652, 0.0
    %v1006 = vmax.f32 %v936, 0.0
    %v1007 = vmax.f32 %v938, 0.0
    %v1008 = vmax.f32 %v656, 0.0
    %v1009 = vmax.f32 %v658, 0.0
    %v1010 = vmax.f32 %v942, 0.0
    %v1011 = vmax.f32 %v944, 0.0
    %v1012 = vmax.f32 %v662, 0.0
    %v1013 = vmax.f32 %v664, 0.0
    %v1014 = vmax.f32 %v948, 0.0
    %v1015 = vmax.f32 %v950, 0.0
    %v1016 = vmax.f32 %v668, 0.0
    %v1017 = vmax.f32 %v670, 0.0
    %v1018 = vmax.f32 %v954, 0.0
    %v1019 = vmax.f32 %v956, 0.0
    %v1020 = vmax.f32 %v674, 0.0
    %v1021 = vmax.f32 %v676, 0.0
    %v1022 = vmax.f32 %v960, 0.0
    %v1023 = vmax.f32 %v962, 0.0
    %v1024 = vmax.f32 %v680, 0.0
    %v1025 = vmax.f32 %v682, 0.0
    %v1026 = vmax.f32 %v966, 0.0
    %v1027 = vmax.f32 %v968, 0.0
    %v1028 = vmax.f32 %v686, 0.0
    %v1029 = vmax.f32 %v688, 0.0
    %v1030 = vmax.f32 %v972, 0.0
    %v1031 = vmax.f32 %v974, 0.0
    %v1032 = vmax.f32 %v692, 0.0
    %v1033 = vmax.f32 %v694, 0.0
    %v1034 = vmax.f32 %v978, 0.0
    %v1035 = vmax.f32 %v980, 0.0
    %v1036 = vmax.f32 %v698, 0.0
    %v1037 = vmax.f32 %v700, 0.0
    %v1038 = vmax.f32 %v984, 0.0
    %v1039 = vmax.f32 %v986, 0.0
    %v1040 = vld [vmem:[#allocation9] sm:$0xff]
    %v1041 = vld [vmem:[#allocation9 + $0x8] sm:$0xff]
    %v1042 = vld [vmem:[#allocation9 + $0x10] sm:$0xff]
    %v1043 = vld [vmem:[#allocation9 + $0x18] sm:$0xff]
    %v1044 = vld [vmem:[#allocation9 + $0x20] sm:$0xff]
    %v1045 = vld [vmem:[#allocation9 + $0x28] sm:$0xff]
    %v1046 = vld [vmem:[#allocation9 + $0x30] sm:$0xff]
    %v1047 = vld [vmem:[#allocation9 + $0x38] sm:$0xff]
    %v1048 = vld [vmem:[#allocation9 + $0x40] sm:$0xff]
    %v1049 = vld [vmem:[#allocation9 + $0x48] sm:$0xff]
    %v1050 = vld [vmem:[#allocation9 + $0x50] sm:$0xff]
    %v1051 = vld [vmem:[#allocation9 + $0x58] sm:$0xff]
    %v1052 = vld [vmem:[#allocation9 + $0x60] sm:$0xff]
    %v1053 = vld [vmem:[#allocation9 + $0x68] sm:$0xff]
    %v1054 = vld [vmem:[#allocation9 + $0x70] sm:$0xff]
    %v1055 = vld [vmem:[#allocation9 + $0x78] sm:$0xff]
    %v1056 = vld [vmem:[#allocation9 + $0x80] sm:$0xff]
    %v1057 = vld [vmem:[#allocation9 + $0x88] sm:$0xff]
    %v1058 = vld [vmem:[#allocation9 + $0x90] sm:$0xff]
    %v1059 = vld [vmem:[#allocation9 + $0x98] sm:$0xff]
    %v1060 = vld [vmem:[#allocation9 + $0xa0] sm:$0xff]
    %v1061 = vld [vmem:[#allocation9 + $0xa8] sm:$0xff]
    %v1062 = vld [vmem:[#allocation9 + $0xb0] sm:$0xff]
    %v1063 = vld [vmem:[#allocation9 + $0xb8] sm:$0xff]
    %v1064 = vld [vmem:[#allocation9 + $0xc0] sm:$0xff]
    %v1065 = vld [vmem:[#allocation9 + $0xc8] sm:$0xff]
    %v1066 = vld [vmem:[#allocation9 + $0xd0] sm:$0xff]
    %v1067 = vld [vmem:[#allocation9 + $0xd8] sm:$0xff]
    %v1068 = vld [vmem:[#allocation9 + $0xe0] sm:$0xff]
    %v1069 = vld [vmem:[#allocation9 + $0xe8] sm:$0xff]
    %v1070 = vld [vmem:[#allocation9 + $0xf0] sm:$0xff]
    %v1071 = vld [vmem:[#allocation9 + $0xf8] sm:$0xff]
    %v1072 = vld [vmem:[#allocation9 + $0x100] sm:$0xff]
    %v1073 = vld [vmem:[#allocation9 + $0x108] sm:$0xff]
    %v1074 = vld [vmem:[#allocation9 + $0x110] sm:$0xff]
    %v1075 = vld [vmem:[#allocation9 + $0x118] sm:$0xff]
    %v1076 = vld [vmem:[#allocation9 + $0x120] sm:$0xff]
    %v1077 = vld [vmem:[#allocation9 + $0x128] sm:$0xff]
    %v1078 = vld [vmem:[#allocation9 + $0x130] sm:$0xff]
    %v1079 = vld [vmem:[#allocation9 + $0x138] sm:$0xff]
    %v1080 = vld [vmem:[#allocation9 + $0x140] sm:$0xff]
    %v1081 = vld [vmem:[#allocation9 + $0x148] sm:$0xff]
    %v1082 = vld [vmem:[#allocation9 + $0x150] sm:$0xff]
    %v1083 = vld [vmem:[#allocation9 + $0x158] sm:$0xff]
    %v1084 = vld [vmem:[#allocation9 + $0x160] sm:$0xff]
    %v1085 = vld [vmem:[#allocation9 + $0x168] sm:$0xff]
    %v1086 = vld [vmem:[#allocation9 + $0x170] sm:$0xff]
    %v1087 = vld [vmem:[#allocation9 + $0x178] sm:$0xff]
    %v1088 = vld [vmem:[#allocation9 + $0x180] sm:$0xff]
    %v1089 = vld [vmem:[#allocation9 + $0x188] sm:$0xff]
    %v1090 = vld [vmem:[#allocation9 + $0x190] sm:$0xff]
    %v1091 = vld [vmem:[#allocation9 + $0x198] sm:$0xff]
    %v1092 = vld [vmem:[#allocation9 + $0x1a0] sm:$0xff]
    %v1093 = vld [vmem:[#allocation9 + $0x1a8] sm:$0xff]
    %v1094 = vld [vmem:[#allocation9 + $0x1b0] sm:$0xff]
    %v1095 = vld [vmem:[#allocation9 + $0x1b8] sm:$0xff]
    %v1096 = vld [vmem:[#allocation9 + $0x1c0] sm:$0xff]
    %v1097 = vld [vmem:[#allocation9 + $0x1c8] sm:$0xff]
    %v1098 = vld [vmem:[#allocation9 + $0x1d0] sm:$0xff]
    %v1099 = vld [vmem:[#allocation9 + $0x1d8] sm:$0xff]
    %v1100 = vld [vmem:[#allocation9 + $0x1e0] sm:$0xff]
    %v1101 = vld [vmem:[#allocation9 + $0x1e8] sm:$0xff]
    %v1102 = vld [vmem:[#allocation9 + $0x1f0] sm:$0xff]
    %v1103 = vld [vmem:[#allocation9 + $0x1f8] sm:$0xff]
    %v1104 = vld [vmem:[#allocation9 + $0x200] sm:$0xff]
    %v1105 = vld [vmem:[#allocation9 + $0x208] sm:$0xff]
    %v1106 = vld [vmem:[#allocation9 + $0x210] sm:$0xff]
    %v1107 = vld [vmem:[#allocation9 + $0x218] sm:$0xff]
    %v1108 = vld [vmem:[#allocation9 + $0x220] sm:$0xff]
    %v1109 = vld [vmem:[#allocation9 + $0x228] sm:$0xff]
    %v1110 = vld [vmem:[#allocation9 + $0x230] sm:$0xff]
    %v1111 = vld [vmem:[#allocation9 + $0x238] sm:$0xff]
    %v1112 = vld [vmem:[#allocation9 + $0x240] sm:$0xff]
    %v1113 = vld [vmem:[#allocation9 + $0x248] sm:$0xff]
    %v1114 = vld [vmem:[#allocation9 + $0x250] sm:$0xff]
    %v1115 = vld [vmem:[#allocation9 + $0x258] sm:$0xff]
    %v1116 = vld [vmem:[#allocation9 + $0x260] sm:$0xff]
    %v1117 = vld [vmem:[#allocation9 + $0x268] sm:$0xff]
    %v1118 = vld [vmem:[#allocation9 + $0x270] sm:$0xff]
    %v1119 = vld [vmem:[#allocation9 + $0x278] sm:$0xff]
    %v1120 = vld [vmem:[#allocation9 + $0x280] sm:$0xff]
    %v1121 = vld [vmem:[#allocation9 + $0x288] sm:$0xff]
    %v1122 = vld [vmem:[#allocation9 + $0x290] sm:$0xff]
    %v1123 = vld [vmem:[#allocation9 + $0x298] sm:$0xff]
    %v1124 = vld [vmem:[#allocation9 + $0x2a0] sm:$0xff]
    %v1125 = vld [vmem:[#allocation9 + $0x2a8] sm:$0xff]
    %v1126 = vld [vmem:[#allocation9 + $0x2b0] sm:$0xff]
    %v1127 = vld [vmem:[#allocation9 + $0x2b8] sm:$0xff]
    %v1128 = vld [vmem:[#allocation9 + $0x2c0] sm:$0xff]
    %v1129 = vld [vmem:[#allocation9 + $0x2c8] sm:$0xff]
    %v1130 = vld [vmem:[#allocation9 + $0x2d0] sm:$0xff]
    %v1131 = vld [vmem:[#allocation9 + $0x2d8] sm:$0xff]
    %v1132 = vld [vmem:[#allocation9 + $0x2e0] sm:$0xff]
    %v1133 = vld [vmem:[#allocation9 + $0x2e8] sm:$0xff]
    %v1134 = vld [vmem:[#allocation9 + $0x2f0] sm:$0xff]
    %v1135 = vld [vmem:[#allocation9 + $0x2f8] sm:$0xff]
    %v1136 = vld [vmem:[#allocation9 + $0x300] sm:$0xff]
    %v1137 = vld [vmem:[#allocation9 + $0x308] sm:$0xff]
    %v1138 = vld [vmem:[#allocation9 + $0x310] sm:$0xff]
    %v1139 = vld [vmem:[#allocation9 + $0x318] sm:$0xff]
    %v1140 = vld [vmem:[#allocation9 + $0x320] sm:$0xff]
    %v1141 = vld [vmem:[#allocation9 + $0x328] sm:$0xff]
    %v1142 = vld [vmem:[#allocation9 + $0x330] sm:$0xff]
    %v1143 = vld [vmem:[#allocation9 + $0x338] sm:$0xff]
    %v1144 = vld [vmem:[#allocation9 + $0x340] sm:$0xff]
    %v1145 = vld [vmem:[#allocation9 + $0x348] sm:$0xff]
    %v1146 = vld [vmem:[#allocation9 + $0x350] sm:$0xff]
    %v1147 = vld [vmem:[#allocation9 + $0x358] sm:$0xff]
    %v1148 = vld [vmem:[#allocation9 + $0x360] sm:$0xff]
    %v1149 = vld [vmem:[#allocation9 + $0x368] sm:$0xff]
    %v1150 = vld [vmem:[#allocation9 + $0x370] sm:$0xff]
    %v1151 = vld [vmem:[#allocation9 + $0x378] sm:$0xff]
    %v1152 = vld [vmem:[#allocation9 + $0x380] sm:$0xff]
    %v1153 = vld [vmem:[#allocation9 + $0x388] sm:$0xff]
    %v1154 = vld [vmem:[#allocation9 + $0x390] sm:$0xff]
    %v1155 = vld [vmem:[#allocation9 + $0x398] sm:$0xff]
    %v1156 = vld [vmem:[#allocation9 + $0x3a0] sm:$0xff]
    %v1157 = vld [vmem:[#allocation9 + $0x3a8] sm:$0xff]
    %v1158 = vld [vmem:[#allocation9 + $0x3b0] sm:$0xff]
    %v1159 = vld [vmem:[#allocation9 + $0x3b8] sm:$0xff]
    %v1160 = vld [vmem:[#allocation9 + $0x3c0] sm:$0xff]
    %v1161 = vld [vmem:[#allocation9 + $0x3c8] sm:$0xff]
    %v1162 = vld [vmem:[#allocation9 + $0x3d0] sm:$0xff]
    %v1163 = vld [vmem:[#allocation9 + $0x3d8] sm:$0xff]
    %v1164 = vld [vmem:[#allocation9 + $0x3e0] sm:$0xff]
    %v1165 = vld [vmem:[#allocation9 + $0x3e8] sm:$0xff]
    %v1166 = vld [vmem:[#allocation9 + $0x3f0] sm:$0xff]
    %v1167 = vld [vmem:[#allocation9 + $0x3f8] sm:$0xff]
    %v1168 = vld [vmem:[#allocation9 + $0x400] sm:$0xff]
    %v1169 = vld [vmem:[#allocation9 + $0x408] sm:$0xff]
    %v1170 = vld [vmem:[#allocation9 + $0x410] sm:$0xff]
    %v1171 = vld [vmem:[#allocation9 + $0x418] sm:$0xff]
    %v1172 = vld [vmem:[#allocation9 + $0x420] sm:$0xff]
    %v1173 = vld [vmem:[#allocation9 + $0x428] sm:$0xff]
    %v1174 = vld [vmem:[#allocation9 + $0x430] sm:$0xff]
    %v1175 = vld [vmem:[#allocation9 + $0x438] sm:$0xff]
    %v1176 = vld [vmem:[#allocation9 + $0x440] sm:$0xff]
    %v1177 = vld [vmem:[#allocation9 + $0x448] sm:$0xff]
    %v1178 = vld [vmem:[#allocation9 + $0x450] sm:$0xff]
    %v1179 = vld [vmem:[#allocation9 + $0x458] sm:$0xff]
    %v1180 = vld [vmem:[#allocation9 + $0x460] sm:$0xff]
    %v1181 = vld [vmem:[#allocation9 + $0x468] sm:$0xff]
    %v1182 = vld [vmem:[#allocation9 + $0x470] sm:$0xff]
    %v1183 = vld [vmem:[#allocation9 + $0x478] sm:$0xff]
    %v1184 = vld [vmem:[#allocation9 + $0x480] sm:$0xff]
    %v1185 = vld [vmem:[#allocation9 + $0x488] sm:$0xff]
    %v1186 = vld [vmem:[#allocation9 + $0x490] sm:$0xff]
    %v1187 = vld [vmem:[#allocation9 + $0x498] sm:$0xff]
    %v1188 = vld [vmem:[#allocation9 + $0x4a0] sm:$0xff]
    %v1189 = vld [vmem:[#allocation9 + $0x4a8] sm:$0xff]
    %v1190 = vld [vmem:[#allocation9 + $0x4b0] sm:$0xff]
    %v1191 = vld [vmem:[#allocation9 + $0x4b8] sm:$0xff]
    %v1192 = vld [vmem:[#allocation9 + $0x4c0] sm:$0xff]
    %v1193 = vld [vmem:[#allocation9 + $0x4c8] sm:$0xff]
    %v1194 = vld [vmem:[#allocation9 + $0x4d0] sm:$0xff]
    %v1195 = vld [vmem:[#allocation9 + $0x4d8] sm:$0xff]
    %v1196 = vld [vmem:[#allocation9 + $0x4e0] sm:$0xff]
    %v1197 = vld [vmem:[#allocation9 + $0x4e8] sm:$0xff]
    %v1198 = vld [vmem:[#allocation9 + $0x4f0] sm:$0xff]
    %v1199 = vld [vmem:[#allocation9 + $0x4f8] sm:$0xff]
    %v1200 = vld [vmem:[#allocation9 + $0x500] sm:$0xff]
    %v1201 = vld [vmem:[#allocation9 + $0x508] sm:$0xff]
    %v1202 = vld [vmem:[#allocation9 + $0x510] sm:$0xff]
    %v1203 = vld [vmem:[#allocation9 + $0x518] sm:$0xff]
    %v1204 = vld [vmem:[#allocation9 + $0x520] sm:$0xff]
    %v1205 = vld [vmem:[#allocation9 + $0x528] sm:$0xff]
    %v1206 = vld [vmem:[#allocation9 + $0x530] sm:$0xff]
    %v1207 = vld [vmem:[#allocation9 + $0x538] sm:$0xff]
    %v1208 = vld [vmem:[#allocation9 + $0x540] sm:$0xff]
    %v1209 = vld [vmem:[#allocation9 + $0x548] sm:$0xff]
    %v1210 = vld [vmem:[#allocation9 + $0x550] sm:$0xff]
    %v1211 = vld [vmem:[#allocation9 + $0x558] sm:$0xff]
    %v1212 = vld [vmem:[#allocation9 + $0x560] sm:$0xff]
    %v1213 = vld [vmem:[#allocation9 + $0x568] sm:$0xff]
    %v1214 = vld [vmem:[#allocation9 + $0x570] sm:$0xff]
    %v1215 = vld [vmem:[#allocation9 + $0x578] sm:$0xff]
    %v1216 = vld [vmem:[#allocation9 + $0x580] sm:$0xff]
    %v1217 = vld [vmem:[#allocation9 + $0x588] sm:$0xff]
    %v1218 = vld [vmem:[#allocation9 + $0x590] sm:$0xff]
    %v1219 = vld [vmem:[#allocation9 + $0x598] sm:$0xff]
    %v1220 = vld [vmem:[#allocation9 + $0x5a0] sm:$0xff]
    %v1221 = vld [vmem:[#allocation9 + $0x5a8] sm:$0xff]
    %v1222 = vld [vmem:[#allocation9 + $0x5b0] sm:$0xff]
    %v1223 = vld [vmem:[#allocation9 + $0x5b8] sm:$0xff]
    %v1224 = vld [vmem:[#allocation9 + $0x5c0] sm:$0xff]
    %v1225 = vld [vmem:[#allocation9 + $0x5c8] sm:$0xff]
    %v1226 = vld [vmem:[#allocation9 + $0x5d0] sm:$0xff]
    %v1227 = vld [vmem:[#allocation9 + $0x5d8] sm:$0xff]
    %v1228 = vld [vmem:[#allocation9 + $0x5e0] sm:$0xff]
    %v1229 = vld [vmem:[#allocation9 + $0x5e8] sm:$0xff]
    %v1230 = vld [vmem:[#allocation9 + $0x5f0] sm:$0xff]
    %v1231 = vld [vmem:[#allocation9 + $0x5f8] sm:$0xff]
    %v1232 = vld [vmem:[#allocation9 + $0x600] sm:$0xff]
    %v1233 = vld [vmem:[#allocation9 + $0x608] sm:$0xff]
    %v1234 = vld [vmem:[#allocation9 + $0x610] sm:$0xff]
    %v1235 = vld [vmem:[#allocation9 + $0x618] sm:$0xff]
    %v1236 = vld [vmem:[#allocation9 + $0x620] sm:$0xff]
    %v1237 = vld [vmem:[#allocation9 + $0x628] sm:$0xff]
    %v1238 = vld [vmem:[#allocation9 + $0x630] sm:$0xff]
    %v1239 = vld [vmem:[#allocation9 + $0x638] sm:$0xff]
    %v1240 = vld [vmem:[#allocation9 + $0x640] sm:$0xff]
    %v1241 = vld [vmem:[#allocation9 + $0x648] sm:$0xff]
    %v1242 = vld [vmem:[#allocation9 + $0x650] sm:$0xff]
    %v1243 = vld [vmem:[#allocation9 + $0x658] sm:$0xff]
    %v1244 = vld [vmem:[#allocation9 + $0x660] sm:$0xff]
    %v1245 = vld [vmem:[#allocation9 + $0x668] sm:$0xff]
    %v1246 = vld [vmem:[#allocation9 + $0x670] sm:$0xff]
    %v1247 = vld [vmem:[#allocation9 + $0x678] sm:$0xff]
    %v1248 = vld [vmem:[#allocation9 + $0x680] sm:$0xff]
    %v1249 = vld [vmem:[#allocation9 + $0x688] sm:$0xff]
    %v1250 = vld [vmem:[#allocation9 + $0x690] sm:$0xff]
    %v1251 = vld [vmem:[#allocation9 + $0x698] sm:$0xff]
    %v1252 = vld [vmem:[#allocation9 + $0x6a0] sm:$0xff]
    %v1253 = vld [vmem:[#allocation9 + $0x6a8] sm:$0xff]
    %v1254 = vld [vmem:[#allocation9 + $0x6b0] sm:$0xff]
    %v1255 = vld [vmem:[#allocation9 + $0x6b8] sm:$0xff]
    %v1256 = vld [vmem:[#allocation9 + $0x6c0] sm:$0xff]
    %v1257 = vld [vmem:[#allocation9 + $0x6c8] sm:$0xff]
    %v1258 = vld [vmem:[#allocation9 + $0x6d0] sm:$0xff]
    %v1259 = vld [vmem:[#allocation9 + $0x6d8] sm:$0xff]
    %v1260 = vld [vmem:[#allocation9 + $0x6e0] sm:$0xff]
    %v1261 = vld [vmem:[#allocation9 + $0x6e8] sm:$0xff]
    %v1262 = vld [vmem:[#allocation9 + $0x6f0] sm:$0xff]
    %v1263 = vld [vmem:[#allocation9 + $0x6f8] sm:$0xff]
    %v1264 = vld [vmem:[#allocation9 + $0x700] sm:$0xff]
    %v1265 = vld [vmem:[#allocation9 + $0x708] sm:$0xff]
    %v1266 = vld [vmem:[#allocation9 + $0x710] sm:$0xff]
    %v1267 = vld [vmem:[#allocation9 + $0x718] sm:$0xff]
    %v1268 = vld [vmem:[#allocation9 + $0x720] sm:$0xff]
    %v1269 = vld [vmem:[#allocation9 + $0x728] sm:$0xff]
    %v1270 = vld [vmem:[#allocation9 + $0x730] sm:$0xff]
    %v1271 = vld [vmem:[#allocation9 + $0x738] sm:$0xff]
    %v1272 = vld [vmem:[#allocation9 + $0x740] sm:$0xff]
    %v1273 = vld [vmem:[#allocation9 + $0x748] sm:$0xff]
    %v1274 = vld [vmem:[#allocation9 + $0x750] sm:$0xff]
    %v1275 = vld [vmem:[#allocation9 + $0x758] sm:$0xff]
    %v1276 = vld [vmem:[#allocation9 + $0x760] sm:$0xff]
    %v1277 = vld [vmem:[#allocation9 + $0x768] sm:$0xff]
    %v1278 = vld [vmem:[#allocation9 + $0x770] sm:$0xff]
    %v1279 = vld [vmem:[#allocation9 + $0x778] sm:$0xff]
    %v1280 = vld [vmem:[#allocation9 + $0x780] sm:$0xff]
    %v1281 = vld [vmem:[#allocation9 + $0x788] sm:$0xff]
    %v1282 = vld [vmem:[#allocation9 + $0x790] sm:$0xff]
    %v1283 = vld [vmem:[#allocation9 + $0x798] sm:$0xff]
    %v1284 = vld [vmem:[#allocation9 + $0x7a0] sm:$0xff]
    %v1285 = vld [vmem:[#allocation9 + $0x7a8] sm:$0xff]
    %v1286 = vld [vmem:[#allocation9 + $0x7b0] sm:$0xff]
    %v1287 = vld [vmem:[#allocation9 + $0x7b8] sm:$0xff]
    %v1288 = vld [vmem:[#allocation9 + $0x7c0] sm:$0xff]
    %v1289 = vld [vmem:[#allocation9 + $0x7c8] sm:$0xff]
    %v1290 = vld [vmem:[#allocation9 + $0x7d0] sm:$0xff]
    %v1291 = vld [vmem:[#allocation9 + $0x7d8] sm:$0xff]
    %v1292 = vld [vmem:[#allocation9 + $0x7e0] sm:$0xff]
    %v1293 = vld [vmem:[#allocation9 + $0x7e8] sm:$0xff]
    %v1294 = vld [vmem:[#allocation9 + $0x7f0] sm:$0xff]
    %v1295 = vld [vmem:[#allocation9 + $0x7f8] sm:$0xff]
    %v1296 = vld [vmem:[%s5] sm:$0xf]
    %v1298 = vlaneseq
    %v1299 = vshrl.u32 %v1298, 7
    %v1300 = vsub.s32 0, %v1299
    %v1301 = vrot.slane %v1296, %v1300
    %v1302 = vlaneseq
    %v1303 = vshrl.u32 %v1302, 7
    %v1304 = vsub.s32 1, %v1303
    %v1305 = vrot.slane %v1296, %v1304
    %v1306 = vlaneseq
    %v1307 = vshrl.u32 %v1306, 7
    %v1308 = vsub.s32 2, %v1307
    %v1309 = vrot.slane %v1296, %v1308
    %v1310 = vlaneseq
    %v1311 = vshrl.u32 %v1310, 7
    %v1312 = vsub.s32 3, %v1311
    %v1313 = vrot.slane %v1296, %v1312
    %v1319 = vcombine.high %v137, %v137
    %v1321 = vunpack.c.l.s4 1983009808
    %v1322 = vunpack.c.0.s8 %v1321
    %v1323 = vlaneseq
    %v1324 = vshrl.u32 %v1323, 7
    %v1325 = vsub.s32 %v1322, %v1324
    %v1326 = vrot.slane %v137, %v1325
    %v1328 = vunpack.c.l.s4 1983009808
    %v1329 = vunpack.c.0.s8 %v1328
    %v1330 = vlaneseq
    %v1331 = vshrl.u32 %v1330, 7
    %v1332 = vsub.s32 %v1329, %v1331
    %v1333 = vrot.slane %v1319, %v1332
    %v1334 = vcombine.high %v1326, %v1326
    %v1335 = vcombine.high %v1333, %v1333
    %1340 = vmatprep.subr.mxu0 %v1041
    %1341 = vmatpush1.msra.mxu0 %v1040
    %1342 = vmatprep.subr.mxu0 %v1045
    %1343 = vmatpush1.msra.mxu0 %v1044
    %1344 = vmatprep.subr.mxu0 %v1049
    %1345 = vmatpush1.msra.mxu0 %v1048
    %1346 = vmatprep.subr.mxu0 %v1053
    %1347 = vmatpush1.msra.mxu0 %v1052
    %1348 = vmatprep.subr.mxu0 %v1057
    %1349 = vmatpush1.msra.mxu0 %v1056
    %1350 = vmatprep.subr.mxu0 %v1061
    %1351 = vmatpush1.msra.mxu0 %v1060
    %1352 = vmatprep.subr.mxu0 %v1065
    %1353 = vmatpush1.msra.mxu0 %v1064
    %1354 = vmatprep.subr.mxu0 %v1069
    %1355 = vmatpush1.msra.mxu0 %v1068
    %1356 = vmatprep.subr.mxu0 %v1073
    %1357 = vmatpush1.msra.mxu0 %v1072
    %1358 = vmatprep.subr.mxu0 %v1077
    %1359 = vmatpush1.msra.mxu0 %v1076
    %1360 = vmatprep.subr.mxu0 %v1081
    %1361 = vmatpush1.msra.mxu0 %v1080
    %1362 = vmatprep.subr.mxu0 %v1085
    %1363 = vmatpush1.msra.mxu0 %v1084
    %1364 = vmatprep.subr.mxu0 %v1089
    %1365 = vmatpush1.msra.mxu0 %v1088
    %1366 = vmatprep.subr.mxu0 %v1093
    %1367 = vmatpush1.msra.mxu0 %v1092
    %1368 = vmatprep.subr.mxu0 %v1097
    %1369 = vmatpush1.msra.mxu0 %v1096
    %1370 = vmatprep.subr.mxu0 %v1101
    %1371 = vmatpush1.msra.mxu0 %v1100
    %1372 = vmatprep.subr.mxu0 %v1105
    %1373 = vmatpush1.msra.mxu0 %v1104
    %1374 = vmatprep.subr.mxu0 %v1109
    %1375 = vmatpush1.msra.mxu0 %v1108
    %1376 = vmatprep.subr.mxu0 %v1113
    %1377 = vmatpush1.msra.mxu0 %v1112
    %1378 = vmatprep.subr.mxu0 %v1117
    %1379 = vmatpush1.msra.mxu0 %v1116
    %1380 = vmatprep.subr.mxu0 %v1121
    %1381 = vmatpush1.msra.mxu0 %v1120
    %1382 = vmatprep.subr.mxu0 %v1125
    %1383 = vmatpush1.msra.mxu0 %v1124
    %1384 = vmatprep.subr.mxu0 %v1129
    %1385 = vmatpush1.msra.mxu0 %v1128
    %1386 = vmatprep.subr.mxu0 %v1133
    %1387 = vmatpush1.msra.mxu0 %v1132
    %1388 = vmatprep.subr.mxu0 %v1137
    %1389 = vmatpush1.msra.mxu0 %v1136
    %1390 = vmatprep.subr.mxu0 %v1141
    %1391 = vmatpush1.msra.mxu0 %v1140
    %1392 = vmatprep.subr.mxu0 %v1145
    %1393 = vmatpush1.msra.mxu0 %v1144
    %1394 = vmatprep.subr.mxu0 %v1149
    %1395 = vmatpush1.msra.mxu0 %v1148
    %1396 = vmatprep.subr.mxu0 %v1153
    %1397 = vmatpush1.msra.mxu0 %v1152
    %1398 = vmatprep.subr.mxu0 %v1157
    %1399 = vmatpush1.msra.mxu0 %v1156
    %1400 = vmatprep.subr.mxu0 %v1161
    %1401 = vmatpush1.msra.mxu0 %v1160
    %1402 = vmatprep.subr.mxu0 %v1165
    %1403 = vmatpush1.msra.mxu0 %v1164
    %1404 = vmatprep.mubr.f32.mxu0 %v1334
    %1405 = vmatmul.mubr.f32.gmra.mrb[0].mxu0 %v1326
    %v1406 = vpop.f32.mrb[0].mxu0
    %v1407 = vadd.f32 %v1301, %v1406
    %v1408 = vpop.f32.mrb[0].mxu0
    %v1409 = vadd.f32 %v1305, %v1408
    %1410 = vdwg.mxu0
    %1411 = vmatprep.subr.mxu0 %v1169
    %1412 = vmatpush1.msra.mxu0 %v1168
    %1413 = vmatprep.subr.mxu0 %v1173
    %1414 = vmatpush1.msra.mxu0 %v1172
    %1415 = vmatprep.subr.mxu0 %v1177
    %1416 = vmatpush1.msra.mxu0 %v1176
    %1417 = vmatprep.subr.mxu0 %v1181
    %1418 = vmatpush1.msra.mxu0 %v1180
    %1419 = vmatprep.subr.mxu0 %v1185
    %1420 = vmatpush1.msra.mxu0 %v1184
    %1421 = vmatprep.subr.mxu0 %v1189
    %1422 = vmatpush1.msra.mxu0 %v1188
    %1423 = vmatprep.subr.mxu0 %v1193
    %1424 = vmatpush1.msra.mxu0 %v1192
    %1425 = vmatprep.subr.mxu0 %v1197
    %1426 = vmatpush1.msra.mxu0 %v1196
    %1427 = vmatprep.subr.mxu0 %v1201
    %1428 = vmatpush1.msra.mxu0 %v1200
    %1429 = vmatprep.subr.mxu0 %v1205
    %1430 = vmatpush1.msra.mxu0 %v1204
    %1431 = vmatprep.subr.mxu0 %v1209
    %1432 = vmatpush1.msra.mxu0 %v1208
    %1433 = vmatprep.subr.mxu0 %v1213
    %1434 = vmatpush1.msra.mxu0 %v1212
    %1435 = vmatprep.subr.mxu0 %v1217
    %1436 = vmatpush1.msra.mxu0 %v1216
    %1437 = vmatprep.subr.mxu0 %v1221
    %1438 = vmatpush1.msra.mxu0 %v1220
    %1439 = vmatprep.subr.mxu0 %v1225
    %1440 = vmatpush1.msra.mxu0 %v1224
    %1441 = vmatprep.subr.mxu0 %v1229
    %1442 = vmatpush1.msra.mxu0 %v1228
    %1443 = vmatprep.subr.mxu0 %v1233
    %1444 = vmatpush1.msra.mxu0 %v1232
    %1445 = vmatprep.subr.mxu0 %v1237
    %1446 = vmatpush1.msra.mxu0 %v1236
    %1447 = vmatprep.subr.mxu0 %v1241
    %1448 = vmatpush1.msra.mxu0 %v1240
    %1449 = vmatprep.subr.mxu0 %v1245
    %1450 = vmatpush1.msra.mxu0 %v1244
    %1451 = vmatprep.subr.mxu0 %v1249
    %1452 = vmatpush1.msra.mxu0 %v1248
    %1453 = vmatprep.subr.mxu0 %v1253
    %1454 = vmatpush1.msra.mxu0 %v1252
    %1455 = vmatprep.subr.mxu0 %v1257
    %1456 = vmatpush1.msra.mxu0 %v1256
    %1457 = vmatprep.subr.mxu0 %v1261
    %1458 = vmatpush1.msra.mxu0 %v1260
    %1459 = vmatprep.subr.mxu0 %v1265
    %1460 = vmatpush1.msra.mxu0 %v1264
    %1461 = vmatprep.subr.mxu0 %v1269
    %1462 = vmatpush1.msra.mxu0 %v1268
    %1463 = vmatprep.subr.mxu0 %v1273
    %1464 = vmatpush1.msra.mxu0 %v1272
    %1465 = vmatprep.subr.mxu0 %v1277
    %1466 = vmatpush1.msra.mxu0 %v1276
    %1467 = vmatprep.subr.mxu0 %v1281
    %1468 = vmatpush1.msra.mxu0 %v1280
    %1469 = vmatprep.subr.mxu0 %v1285
    %1470 = vmatpush1.msra.mxu0 %v1284
    %1471 = vmatprep.subr.mxu0 %v1289
    %1472 = vmatpush1.msra.mxu0 %v1288
    %1473 = vmatprep.subr.mxu0 %v1293
    %1474 = vmatpush1.msra.mxu0 %v1292
    %1475 = vmatprep.mubr.f32.mxu0 %v1335
    %1476 = vmatmul.mubr.f32.gmra.mrb[0].mxu0 %v1333
    %v1477 = vpop.f32.mrb[0].mxu0
    %v1478 = vadd.f32 %v1407, %v1477
    %v1479 = vpop.f32.mrb[0].mxu0
    %v1480 = vadd.f32 %v1409, %v1479
    %1481 = vdwg.mxu0
    %1482 = vmatprep.subr.mxu0 %v1043
    %1483 = vmatpush1.msra.mxu0 %v1042
    %1484 = vmatprep.subr.mxu0 %v1047
    %1485 = vmatpush1.msra.mxu0 %v1046
    %1486 = vmatprep.subr.mxu0 %v1051
    %1487 = vmatpush1.msra.mxu0 %v1050
    %1488 = vmatprep.subr.mxu0 %v1055
    %1489 = vmatpush1.msra.mxu0 %v1054
    %1490 = vmatprep.subr.mxu0 %v1059
    %1491 = vmatpush1.msra.mxu0 %v1058
    %1492 = vmatprep.subr.mxu0 %v1063
    %1493 = vmatpush1.msra.mxu0 %v1062
    %1494 = vmatprep.subr.mxu0 %v1067
    %1495 = vmatpush1.msra.mxu0 %v1066
    %1496 = vmatprep.subr.mxu0 %v1071
    %1497 = vmatpush1.msra.mxu0 %v1070
    %1498 = vmatprep.subr.mxu0 %v1075
    %1499 = vmatpush1.msra.mxu0 %v1074
    %1500 = vmatprep.subr.mxu0 %v1079
    %1501 = vmatpush1.msra.mxu0 %v1078
    %1502 = vmatprep.subr.mxu0 %v1083
    %1503 = vmatpush1.msra.mxu0 %v1082
    %1504 = vmatprep.subr.mxu0 %v1087
    %1505 = vmatpush1.msra.mxu0 %v1086
    %1506 = vmatprep.subr.mxu0 %v1091
    %1507 = vmatpush1.msra.mxu0 %v1090
    %1508 = vmatprep.subr.mxu0 %v1095
    %1509 = vmatpush1.msra.mxu0 %v1094
    %1510 = vmatprep.subr.mxu0 %v1099
    %1511 = vmatpush1.msra.mxu0 %v1098
    %1512 = vmatprep.subr.mxu0 %v1103
    %1513 = vmatpush1.msra.mxu0 %v1102
    %1514 = vmatprep.subr.mxu0 %v1107
    %1515 = vmatpush1.msra.mxu0 %v1106
    %1516 = vmatprep.subr.mxu0 %v1111
    %1517 = vmatpush1.msra.mxu0 %v1110
    %1518 = vmatprep.subr.mxu0 %v1115
    %1519 = vmatpush1.msra.mxu0 %v1114
    %1520 = vmatprep.subr.mxu0 %v1119
    %1521 = vmatpush1.msra.mxu0 %v1118
    %1522 = vmatprep.subr.mxu0 %v1123
    %1523 = vmatpush1.msra.mxu0 %v1122
    %1524 = vmatprep.subr.mxu0 %v1127
    %1525 = vmatpush1.msra.mxu0 %v1126
    %1526 = vmatprep.subr.mxu0 %v1131
    %1527 = vmatpush1.msra.mxu0 %v1130
    %1528 = vmatprep.subr.mxu0 %v1135
    %1529 = vmatpush1.msra.mxu0 %v1134
    %1530 = vmatprep.subr.mxu0 %v1139
    %1531 = vmatpush1.msra.mxu0 %v1138
    %1532 = vmatprep.subr.mxu0 %v1143
    %1533 = vmatpush1.msra.mxu0 %v1142
    %1534 = vmatprep.subr.mxu0 %v1147
    %1535 = vmatpush1.msra.mxu0 %v1146
    %1536 = vmatprep.subr.mxu0 %v1151
    %1537 = vmatpush1.msra.mxu0 %v1150
    %1538 = vmatprep.subr.mxu0 %v1155
    %1539 = vmatpush1.msra.mxu0 %v1154
    %1540 = vmatprep.subr.mxu0 %v1159
    %1541 = vmatpush1.msra.mxu0 %v1158
    %1542 = vmatprep.subr.mxu0 %v1163
    %1543 = vmatpush1.msra.mxu0 %v1162
    %1544 = vmatprep.subr.mxu0 %v1167
    %1545 = vmatpush1.msra.mxu0 %v1166
    %1546 = vmatprep.mubr.f32.mxu0 %v1334
    %1547 = vmatmul.mubr.f32.gmra.mrb[0].mxu0 %v1326
    %v1548 = vpop.f32.mrb[0].mxu0
    %v1549 = vadd.f32 %v1309, %v1548
    %v1550 = vpop.f32.mrb[0].mxu0
    %v1551 = vadd.f32 %v1313, %v1550
    %1552 = vdwg.mxu0
    %1553 = vmatprep.subr.mxu0 %v1171
    %1554 = vmatpush1.msra.mxu0 %v1170
    %1555 = vmatprep.subr.mxu0 %v1175
    %1556 = vmatpush1.msra.mxu0 %v1174
    %1557 = vmatprep.subr.mxu0 %v1179
    %1558 = vmatpush1.msra.mxu0 %v1178
    %1559 = vmatprep.subr.mxu0 %v1183
    %1560 = vmatpush1.msra.mxu0 %v1182
    %1561 = vmatprep.subr.mxu0 %v1187
    %1562 = vmatpush1.msra.mxu0 %v1186
    %1563 = vmatprep.subr.mxu0 %v1191
    %1564 = vmatpush1.msra.mxu0 %v1190
    %1565 = vmatprep.subr.mxu0 %v1195
    %1566 = vmatpush1.msra.mxu0 %v1194
    %1567 = vmatprep.subr.mxu0 %v1199
    %1568 = vmatpush1.msra.mxu0 %v1198
    %1569 = vmatprep.subr.mxu0 %v1203
    %1570 = vmatpush1.msra.mxu0 %v1202
    %1571 = vmatprep.subr.mxu0 %v1207
    %1572 = vmatpush1.msra.mxu0 %v1206
    %1573 = vmatprep.subr.mxu0 %v1211
    %1574 = vmatpush1.msra.mxu0 %v1210
    %1575 = vmatprep.subr.mxu0 %v1215
    %1576 = vmatpush1.msra.mxu0 %v1214
    %1577 = vmatprep.subr.mxu0 %v1219
    %1578 = vmatpush1.msra.mxu0 %v1218
    %1579 = vmatprep.subr.mxu0 %v1223
    %1580 = vmatpush1.msra.mxu0 %v1222
    %1581 = vmatprep.subr.mxu0 %v1227
    %1582 = vmatpush1.msra.mxu0 %v1226
    %1583 = vmatprep.subr.mxu0 %v1231
    %1584 = vmatpush1.msra.mxu0 %v1230
    %1585 = vmatprep.subr.mxu0 %v1235
    %1586 = vmatpush1.msra.mxu0 %v1234
    %1587 = vmatprep.subr.mxu0 %v1239
    %1588 = vmatpush1.msra.mxu0 %v1238
    %1589 = vmatprep.subr.mxu0 %v1243
    %1590 = vmatpush1.msra.mxu0 %v1242
    %1591 = vmatprep.subr.mxu0 %v1247
    %1592 = vmatpush1.msra.mxu0 %v1246
    %1593 = vmatprep.subr.mxu0 %v1251
    %1594 = vmatpush1.msra.mxu0 %v1250
    %1595 = vmatprep.subr.mxu0 %v1255
    %1596 = vmatpush1.msra.mxu0 %v1254
    %1597 = vmatprep.subr.mxu0 %v1259
    %1598 = vmatpush1.msra.mxu0 %v1258
    %1599 = vmatprep.subr.mxu0 %v1263
    %1600 = vmatpush1.msra.mxu0 %v1262
    %1601 = vmatprep.subr.mxu0 %v1267
    %1602 = vmatpush1.msra.mxu0 %v1266
    %1603 = vmatprep.subr.mxu0 %v1271
    %1604 = vmatpush1.msra.mxu0 %v1270
    %1605 = vmatprep.subr.mxu0 %v1275
    %1606 = vmatpush1.msra.mxu0 %v1274
    %1607 = vmatprep.subr.mxu0 %v1279
    %1608 = vmatpush1.msra.mxu0 %v1278
    %1609 = vmatprep.subr.mxu0 %v1283
    %1610 = vmatpush1.msra.mxu0 %v1282
    %1611 = vmatprep.subr.mxu0 %v1287
    %1612 = vmatpush1.msra.mxu0 %v1286
    %1613 = vmatprep.subr.mxu0 %v1291
    %1614 = vmatpush1.msra.mxu0 %v1290
    %1615 = vmatprep.subr.mxu0 %v1295
    %1616 = vmatpush1.msra.mxu0 %v1294
    %1617 = vmatprep.mubr.f32.mxu0 %v1335
    %1618 = vmatmul.mubr.f32.gmra.mrb[0].mxu0 %v1333
    %v1619 = vpop.f32.mrb[0].mxu0
    %v1620 = vadd.f32 %v1549, %v1619
    %v1621 = vpop.f32.mrb[0].mxu0
    %v1622 = vadd.f32 %v1551, %v1621
    %1623 = vdwg.mxu0
    %v1624 = vmax.f32 %v1478, 0.0
    %v1625 = vmax.f32 %v1480, 0.0
    %v1626 = vmax.f32 %v1620, 0.0
    %v1627 = vmax.f32 %v1622, 0.0
    %v1628 = vld [vmem:[%s6] sm:$0xf]
    %v1630 = vlaneseq
    %v1631 = vshrl.u32 %v1630, 7
    %v1632 = vsub.s32 0, %v1631
    %v1633 = vrot.slane %v1628, %v1632
    %v1634 = vlaneseq
    %v1635 = vshrl.u32 %v1634, 7
    %v1636 = vsub.s32 1, %v1635
    %v1637 = vrot.slane %v1628, %v1636
    %v1638 = vlaneseq
    %v1639 = vshrl.u32 %v1638, 7
    %v1640 = vsub.s32 2, %v1639
    %v1641 = vrot.slane %v1628, %v1640
    %v1642 = vlaneseq
    %v1643 = vshrl.u32 %v1642, 7
    %v1644 = vsub.s32 3, %v1643
    %v1645 = vrot.slane %v1628, %v1644
    %v1650 = vmul.f32 %v1624, %v1633
    %v1651 = vmul.f32 %v1625, %v1637
    %v1652 = vmul.f32 %v1626, %v1641
    %v1653 = vmul.f32 %v1627, %v1645
    %v1654 = vld [vmem:[#allocation2] sm:$0x1]
    %s1655 = vtos %v1654
    %v1656 = vstv %s1655
    %1657 = vmatprep.subr.mxu0 %v1651
    %1658 = vmatpush1.xpose.msra.mxu0 %v1650
    %1659 = vmatprep.subr.mxu0 0.0
    %1660 = vmatpush1.xpose.msra.mxu0 0.0
    %1661 = vmatprep.subr.mxu0 0.0
    %1662 = vmatpush1.xpose.msra.mxu0 0.0
    %1663 = vmatprep.subr.mxu0 0.0
    %1664 = vmatpush1.xpose.msra.mxu0 0.0
    %1665 = vmatprep.subr.mxu0 0.0
    %1666 = vmatpush1.xpose.msra.mxu0 0.0
    %1667 = vmatprep.subr.mxu0 0.0
    %1668 = vmatpush1.xpose.msra.mxu0 0.0
    %1669 = vmatprep.subr.mxu0 0.0
    %1670 = vmatpush1.xpose.msra.mxu0 0.0
    %1671 = vmatprep.subr.mxu0 0.0
    %1672 = vmatpush1.xpose.msra.mxu0 0.0
    %1673 = vmatprep.subr.mxu0 0.0
    %1674 = vmatpush1.xpose.msra.mxu0 0.0
    %1675 = vmatprep.subr.mxu0 0.0
    %1676 = vmatpush1.xpose.msra.mxu0 0.0
    %1677 = vmatprep.subr.mxu0 0.0
    %1678 = vmatpush1.xpose.msra.mxu0 0.0
    %1679 = vmatprep.subr.mxu0 0.0
    %1680 = vmatpush1.xpose.msra.mxu0 0.0
    %1681 = vmatprep.subr.mxu0 0.0
    %1682 = vmatpush1.xpose.msra.mxu0 0.0
    %1683 = vmatprep.subr.mxu0 0.0
    %1684 = vmatpush1.xpose.msra.mxu0 0.0
    %1685 = vmatprep.subr.mxu0 0.0
    %1686 = vmatpush1.xpose.msra.mxu0 0.0
    %1687 = vmatprep.subr.mxu0 0.0
    %1688 = vmatpush1.xpose.msra.mxu0 0.0
    %1689 = vmatprep.subr.mxu0 0.0
    %1690 = vmatpush1.xpose.msra.mxu0 0.0
    %1691 = vmatprep.subr.mxu0 0.0
    %1692 = vmatpush1.xpose.msra.mxu0 0.0
    %1693 = vmatprep.subr.mxu0 0.0
    %1694 = vmatpush1.xpose.msra.mxu0 0.0
    %1695 = vmatprep.subr.mxu0 0.0
    %1696 = vmatpush1.xpose.msra.mxu0 0.0
    %1697 = vmatprep.subr.mxu0 0.0
    %1698 = vmatpush1.xpose.msra.mxu0 0.0
    %1699 = vmatprep.subr.mxu0 0.0
    %1700 = vmatpush1.xpose.msra.mxu0 0.0
    %1701 = vmatprep.subr.mxu0 0.0
    %1702 = vmatpush1.xpose.msra.mxu0 0.0
    %1703 = vmatprep.subr.mxu0 0.0
    %1704 = vmatpush1.xpose.msra.mxu0 0.0
    %1705 = vmatprep.subr.mxu0 0.0
    %1706 = vmatpush1.xpose.msra.mxu0 0.0
    %1707 = vmatprep.subr.mxu0 0.0
    %1708 = vmatpush1.xpose.msra.mxu0 0.0
    %1709 = vmatprep.subr.mxu0 0.0
    %1710 = vmatpush1.xpose.msra.mxu0 0.0
    %1711 = vmatprep.subr.mxu0 0.0
    %1712 = vmatpush1.xpose.msra.mxu0 0.0
    %1713 = vmatprep.subr.mxu0 0.0
    %1714 = vmatpush1.xpose.msra.mxu0 0.0
    %1715 = vmatprep.subr.mxu0 0.0
    %1716 = vmatpush1.xpose.msra.mxu0 0.0
    %1717 = vmatprep.subr.mxu0 0.0
    %1718 = vmatpush1.xpose.msra.mxu0 0.0
    %1719 = vmatprep.subr.mxu0 0.0
    %1720 = vmatpush1.xpose.msra.mxu0 0.0
    %1721 = vmatprep.mubr.f32.mxu0 %v989
    %1722 = vmatmul.mubr.f32.gmra.mrb[0].mxu0 %v988
    %v1723 = vpop.f32.mrb[0].mxu0
    %v1724 = vadd.f32 %v1656, %v1723
    %v1725 = vpop.f32.mrb[0].mxu0
    %1726 = vmatprep.mubr.f32.mxu0 %v993
    %1727 = vmatmul.mubr.f32.gmra.mrb[0].mxu0 %v992
    %v1728 = vpop.f32.mrb[0].mxu0
    %v1729 = vadd.f32 %v1656, %v1728
    %v1730 = vpop.f32.mrb[0].mxu0
    %1731 = vmatprep.mubr.f32.mxu0 %v997
    %1732 = vmatmul.mubr.f32.gmra.mrb[0].mxu0 %v996
    %v1733 = vpop.f32.mrb[0].mxu0
    %v1734 = vadd.f32 %v1656, %v1733
    %v1735 = vpop.f32.mrb[0].mxu0
    %1736 = vmatprep.mubr.f32.mxu0 %v1001
    %1737 = vmatmul.mubr.f32.gmra.mrb[0].mxu0 %v1000
    %v1738 = vpop.f32.mrb[0].mxu0
    %v1739 = vadd.f32 %v1656, %v1738
    %v1740 = vpop.f32.mrb[0].mxu0
    %1741 = vmatprep.mubr.f32.mxu0 %v1005
    %1742 = vmatmul.mubr.f32.gmra.mrb[0].mxu0 %v1004
    %v1743 = vpop.f32.mrb[0].mxu0
    %v1744 = vadd.f32 %v1656, %v1743
    %v1745 = vpop.f32.mrb[0].mxu0
    %1746 = vmatprep.mubr.f32.mxu0 %v1009
    %1747 = vmatmul.mubr.f32.gmra.mrb[0].mxu0 %v1008
    %v1748 = vpop.f32.mrb[0].mxu0
    %v1749 = vadd.f32 %v1656, %v1748
    %v1750 = vpop.f32.mrb[0].mxu0
    %1751 = vmatprep.mubr.f32.mxu0 %v1013
    %1752 = vmatmul.mubr.f32.gmra.mrb[0].mxu0 %v1012
    %v1753 = vpop.f32.mrb[0].mxu0
    %v1754 = vadd.f32 %v1656, %v1753
    %v1755 = vpop.f32.mrb[0].mxu0
    %1756 = vmatprep.mubr.f32.mxu0 %v1017
    %1757 = vmatmul.mubr.f32.gmra.mrb[0].mxu0 %v1016
    %v1758 = vpop.f32.mrb[0].mxu0
    %v1759 = vadd.f32 %v1656, %v1758
    %v1760 = vpop.f32.mrb[0].mxu0
    %1761 = vmatprep.mubr.f32.mxu0 %v1021
    %1762 = vmatmul.mubr.f32.gmra.mrb[0].mxu0 %v1020
    %v1763 = vpop.f32.mrb[0].mxu0
    %v1764 = vadd.f32 %v1656, %v1763
    %v1765 = vpop.f32.mrb[0].mxu0
    %1766 = vmatprep.mubr.f32.mxu0 %v1025
    %1767 = vmatmul.mubr.f32.gmra.mrb[0].mxu0 %v1024
    %v1768 = vpop.f32.mrb[0].mxu0
    %v1769 = vadd.f32 %v1656, %v1768
    %v1770 = vpop.f32.mrb[0].mxu0
    %1771 = vmatprep.mubr.f32.mxu0 %v1029
    %1772 = vmatmul.mubr.f32.gmra.mrb[0].mxu0 %v1028
    %v1773 = vpop.f32.mrb[0].mxu0
    %v1774 = vadd.f32 %v1656, %v1773
    %v1775 = vpop.f32.mrb[0].mxu0
    %1776 = vmatprep.mubr.f32.mxu0 %v1033
    %1777 = vmatmul.mubr.f32.gmra.mrb[0].mxu0 %v1032
    %v1778 = vpop.f32.mrb[0].mxu0
    %v1779 = vadd.f32 %v1656, %v1778
    %v1780 = vpop.f32.mrb[0].mxu0
    %1781 = vmatprep.mubr.f32.mxu0 %v1037
    %1782 = vmatmul.mubr.f32.gmra.mrb[0].mxu0 %v1036
    %v1783 = vpop.f32.mrb[0].mxu0
    %v1784 = vadd.f32 %v1656, %v1783
    %v1785 = vpop.f32.mrb[0].mxu0
    %1786 = vdwg.mxu0
    %1787 = vmatprep.subr.mxu0 %v1653
    %1788 = vmatpush1.xpose.msra.mxu0 %v1652
    %1789 = vmatprep.subr.mxu0 0.0
    %1790 = vmatpush1.xpose.msra.mxu0 0.0
    %1791 = vmatprep.subr.mxu0 0.0
    %1792 = vmatpush1.xpose.msra.mxu0 0.0
    %1793 = vmatprep.subr.mxu0 0.0
    %1794 = vmatpush1.xpose.msra.mxu0 0.0
    %1795 = vmatprep.subr.mxu0 0.0
    %1796 = vmatpush1.xpose.msra.mxu0 0.0
    %1797 = vmatprep.subr.mxu0 0.0
    %1798 = vmatpush1.xpose.msra.mxu0 0.0
    %1799 = vmatprep.subr.mxu0 0.0
    %1800 = vmatpush1.xpose.msra.mxu0 0.0
    %1801 = vmatprep.subr.mxu0 0.0
    %1802 = vmatpush1.xpose.msra.mxu0 0.0
    %1803 = vmatprep.subr.mxu0 0.0
    %1804 = vmatpush1.xpose.msra.mxu0 0.0
    %1805 = vmatprep.subr.mxu0 0.0
    %1806 = vmatpush1.xpose.msra.mxu0 0.0
    %1807 = vmatprep.subr.mxu0 0.0
    %1808 = vmatpush1.xpose.msra.mxu0 0.0
    %1809 = vmatprep.subr.mxu0 0.0
    %1810 = vmatpush1.xpose.msra.mxu0 0.0
    %1811 = vmatprep.subr.mxu0 0.0
    %1812 = vmatpush1.xpose.msra.mxu0 0.0
    %1813 = vmatprep.subr.mxu0 0.0
    %1814 = vmatpush1.xpose.msra.mxu0 0.0
    %1815 = vmatprep.subr.mxu0 0.0
    %1816 = vmatpush1.xpose.msra.mxu0 0.0
    %1817 = vmatprep.subr.mxu0 0.0
    %1818 = vmatpush1.xpose.msra.mxu0 0.0
    %1819 = vmatprep.subr.mxu0 0.0
    %1820 = vmatpush1.xpose.msra.mxu0 0.0
    %1821 = vmatprep.subr.mxu0 0.0
    %1822 = vmatpush1.xpose.msra.mxu0 0.0
    %1823 = vmatprep.subr.mxu0 0.0
    %1824 = vmatpush1.xpose.msra.mxu0 0.0
    %1825 = vmatprep.subr.mxu0 0.0
    %1826 = vmatpush1.xpose.msra.mxu0 0.0
    %1827 = vmatprep.subr.mxu0 0.0
    %1828 = vmatpush1.xpose.msra.mxu0 0.0
    %1829 = vmatprep.subr.mxu0 0.0
    %1830 = vmatpush1.xpose.msra.mxu0 0.0
    %1831 = vmatprep.subr.mxu0 0.0
    %1832 = vmatpush1.xpose.msra.mxu0 0.0
    %1833 = vmatprep.subr.mxu0 0.0
    %1834 = vmatpush1.xpose.msra.mxu0 0.0
    %1835 = vmatprep.subr.mxu0 0.0
    %1836 = vmatpush1.xpose.msra.mxu0 0.0
    %1837 = vmatprep.subr.mxu0 0.0
    %1838 = vmatpush1.xpose.msra.mxu0 0.0
    %1839 = vmatprep.subr.mxu0 0.0
    %1840 = vmatpush1.xpose.msra.mxu0 0.0
    %1841 = vmatprep.subr.mxu0 0.0
    %1842 = vmatpush1.xpose.msra.mxu0 0.0
    %1843 = vmatprep.subr.mxu0 0.0
    %1844 = vmatpush1.xpose.msra.mxu0 0.0
    %1845 = vmatprep.subr.mxu0 0.0
    %1846 = vmatpush1.xpose.msra.mxu0 0.0
    %1847 = vmatprep.subr.mxu0 0.0
    %1848 = vmatpush1.xpose.msra.mxu0 0.0
    %1849 = vmatprep.subr.mxu0 0.0
    %1850 = vmatpush1.xpose.msra.mxu0 0.0
    %1851 = vmatprep.mubr.f32.mxu0 %v991
    %1852 = vmatmul.mubr.f32.gmra.mrb[0].mxu0 %v990
    %v1853 = vpop.f32.mrb[0].mxu0
    %v1854 = vadd.f32 %v1724, %v1853
    %v1855 = vpop.f32.mrb[0].mxu0
    %1856 = vmatprep.mubr.f32.mxu0 %v995
    %1857 = vmatmul.mubr.f32.gmra.mrb[0].mxu0 %v994
    %v1858 = vpop.f32.mrb[0].mxu0
    %v1859 = vadd.f32 %v1729, %v1858
    %v1860 = vpop.f32.mrb[0].mxu0
    %1861 = vmatprep.mubr.f32.mxu0 %v999
    %1862 = vmatmul.mubr.f32.gmra.mrb[0].mxu0 %v998
    %v1863 = vpop.f32.mrb[0].mxu0
    %v1864 = vadd.f32 %v1734, %v1863
    %v1865 = vpop.f32.mrb[0].mxu0
    %1866 = vmatprep.mubr.f32.mxu0 %v1003
    %1867 = vmatmul.mubr.f32.gmra.mrb[0].mxu0 %v1002
    %v1868 = vpop.f32.mrb[0].mxu0
    %v1869 = vadd.f32 %v1739, %v1868
    %v1870 = vpop.f32.mrb[0].mxu0
    %1871 = vmatprep.mubr.f32.mxu0 %v1007
    %1872 = vmatmul.mubr.f32.gmra.mrb[0].mxu0 %v1006
    %v1873 = vpop.f32.mrb[0].mxu0
    %v1874 = vadd.f32 %v1744, %v1873
    %v1875 = vpop.f32.mrb[0].mxu0
    %1876 = vmatprep.mubr.f32.mxu0 %v1011
    %1877 = vmatmul.mubr.f32.gmra.mrb[0].mxu0 %v1010
    %v1878 = vpop.f32.mrb[0].mxu0
    %v1879 = vadd.f32 %v1749, %v1878
    %v1880 = vpop.f32.mrb[0].mxu0
    %1881 = vmatprep.mubr.f32.mxu0 %v1015
    %1882 = vmatmul.mubr.f32.gmra.mrb[0].mxu0 %v1014
    %v1883 = vpop.f32.mrb[0].mxu0
    %v1884 = vadd.f32 %v1754, %v1883
    %v1885 = vpop.f32.mrb[0].mxu0
    %1886 = vmatprep.mubr.f32.mxu0 %v1019
    %1887 = vmatmul.mubr.f32.gmra.mrb[0].mxu0 %v1018
    %v1888 = vpop.f32.mrb[0].mxu0
    %v1889 = vadd.f32 %v1759, %v1888
    %v1890 = vpop.f32.mrb[0].mxu0
    %1891 = vmatprep.mubr.f32.mxu0 %v1023
    %1892 = vmatmul.mubr.f32.gmra.mrb[0].mxu0 %v1022
    %v1893 = vpop.f32.mrb[0].mxu0
    %v1894 = vadd.f32 %v1764, %v1893
    %v1895 = vpop.f32.mrb[0].mxu0
    %1896 = vmatprep.mubr.f32.mxu0 %v1027
    %1897 = vmatmul.mubr.f32.gmra.mrb[0].mxu0 %v1026
    %v1898 = vpop.f32.mrb[0].mxu0
    %v1899 = vadd.f32 %v1769, %v1898
    %v1900 = vpop.f32.mrb[0].mxu0
    %1901 = vmatprep.mubr.f32.mxu0 %v1031
    %1902 = vmatmul.mubr.f32.gmra.mrb[0].mxu0 %v1030
    %v1903 = vpop.f32.mrb[0].mxu0
    %v1904 = vadd.f32 %v1774, %v1903
    %v1905 = vpop.f32.mrb[0].mxu0
    %1906 = vmatprep.mubr.f32.mxu0 %v1035
    %1907 = vmatmul.mubr.f32.gmra.mrb[0].mxu0 %v1034
    %v1908 = vpop.f32.mrb[0].mxu0
    %v1909 = vadd.f32 %v1779, %v1908
    %v1910 = vpop.f32.mrb[0].mxu0
    %1911 = vmatprep.mubr.f32.mxu0 %v1039
    %1912 = vmatmul.mubr.f32.gmra.mrb[0].mxu0 %v1038
    %v1913 = vpop.f32.mrb[0].mxu0
    %v1914 = vadd.f32 %v1784, %v1913
    %v1915 = vpop.f32.mrb[0].mxu0
    %1916 = vdwg.mxu0
    %v1917 = vlaneseq
    %v1918 = vshrl.u32 %v1917, 7
    %v1919 = vadd.s32 %v1918, 8
    %v1920 = vadd.s32 %v1918, 16
    %v1921 = vadd.s32 %v1918, 24
    %v1922 = vadd.s32 %v1918, 32
    %v1923 = vadd.s32 %v1918, 40
    %v1924 = vadd.s32 %v1918, 48
    %v1925 = vadd.s32 %v1918, 56
    %v1926 = vadd.s32 %v1918, 64
    %v1927 = vadd.s32 %v1918, 72
    %v1928 = vadd.s32 %v1918, 80
    %v1929 = vadd.s32 %v1918, 88
    %v1930 = vadd.s32 %v1918, 96
    %v1931 = vlaneseq
    %v1932 = vand.u32 %v1931, 127
    %v1933 = vmul.u32 %v1932, 49
    %v1934 = vsub.s32 %v1918, %v1933
    %v1935 = vsub.s32 %v1919, %v1933
    %v1936 = vsub.s32 %v1920, %v1933
    %v1937 = vsub.s32 %v1921, %v1933
    %v1938 = vsub.s32 %v1922, %v1933
    %v1939 = vsub.s32 %v1923, %v1933
    %v1940 = vsub.s32 %v1924, %v1933
    %v1941 = vsub.s32 %v1925, %v1933
    %v1942 = vsub.s32 %v1926, %v1933
    %v1943 = vsub.s32 %v1927, %v1933
    %v1944 = vsub.s32 %v1928, %v1933
    %v1945 = vsub.s32 %v1929, %v1933
    %v1946 = vsub.s32 %v1930, %v1933
    %vm1947 = vcmp.ge.s32.totalorder %v1934, 0
    %vm1948 = vcmp.ge.s32.totalorder %v1935, 0
    %vm1949 = vcmp.ge.s32.totalorder %v1936, 0
    %vm1950 = vcmp.ge.s32.totalorder %v1937, 0
    %vm1951 = vcmp.ge.s32.totalorder %v1938, 0
    %vm1952 = vcmp.ge.s32.totalorder %v1939, 0
    %vm1953 = vcmp.ge.s32.totalorder %v1940, 0
    %vm1954 = vcmp.ge.s32.totalorder %v1941, 0
    %vm1955 = vcmp.ge.s32.totalorder %v1942, 0
    %vm1956 = vcmp.ge.s32.totalorder %v1943, 0
    %vm1957 = vcmp.ge.s32.totalorder %v1944, 0
    %vm1958 = vcmp.ge.s32.totalorder %v1945, 0
    %vm1959 = vcmp.ge.s32.totalorder %v1946, 0
    %vm1960 = vcmp.lt.s32.totalorder %v1934, 49
    %vm1961 = vcmp.lt.s32.totalorder %v1935, 49
    %vm1962 = vcmp.lt.s32.totalorder %v1936, 49
    %vm1963 = vcmp.lt.s32.totalorder %v1937, 49
    %vm1964 = vcmp.lt.s32.totalorder %v1938, 49
    %vm1965 = vcmp.lt.s32.totalorder %v1939, 49
    %vm1966 = vcmp.lt.s32.totalorder %v1940, 49
    %vm1967 = vcmp.lt.s32.totalorder %v1941, 49
    %vm1968 = vcmp.lt.s32.totalorder %v1942, 49
    %vm1969 = vcmp.lt.s32.totalorder %v1943, 49
    %vm1970 = vcmp.lt.s32.totalorder %v1944, 49
    %vm1971 = vcmp.lt.s32.totalorder %v1945, 49
    %vm1972 = vcmp.lt.s32.totalorder %v1946, 49
    %vm1973 = vmand %vm1947, %vm1960
    %vm1974 = vmand %vm1948, %vm1961
    %vm1975 = vmand %vm1949, %vm1962
    %vm1976 = vmand %vm1950, %vm1963
    %vm1977 = vmand %vm1951, %vm1964
    %vm1978 = vmand %vm1952, %vm1965
    %vm1979 = vmand %vm1953, %vm1966
    %vm1980 = vmand %vm1954, %vm1967
    %vm1981 = vmand %vm1955, %vm1968
    %vm1982 = vmand %vm1956, %vm1969
    %vm1983 = vmand %vm1957, %vm1970
    %vm1984 = vmand %vm1958, %vm1971
    %vm1985 = vmand %vm1959, %vm1972
    %v1986 = vsel %vm1973, %v1854, -1e+30
    %v1987 = vsel %vm1974, %v1859, -1e+30
    %v1988 = vsel %vm1975, %v1864, -1e+30
    %v1989 = vsel %vm1976, %v1869, -1e+30
    %v1990 = vsel %vm1977, %v1874, -1e+30
    %v1991 = vsel %vm1978, %v1879, -1e+30
    %v1992 = vsel %vm1979, %v1884, -1e+30
    %v1993 = vsel %vm1980, %v1889, -1e+30
    %v1994 = vsel %vm1981, %v1894, -1e+30
    %v1995 = vsel %vm1982, %v1899, -1e+30
    %v1996 = vsel %vm1983, %v1904, -1e+30
    %v1997 = vsel %vm1984, %v1909, -1e+30
    %v1998 = vsel %vm1985, %v1914, -1e+30
    %vm1999 = vcmask 15360
    %v2000 = vsel %vm1999, %v1986, -inf
    %v2001 = vsel %vm1999, %v1987, -inf
    %v2002 = vsel %vm1999, %v1988, -inf
    %v2003 = vsel %vm1999, %v1989, -inf
    %v2004 = vsel %vm1999, %v1990, -inf
    %v2005 = vmax.f32 %v2000, %v2004
    %v2006 = vsel %vm1999, %v1991, -inf
    %v2007 = vmax.f32 %v2001, %v2006
    %v2008 = vsel %vm1999, %v1992, -inf
    %v2009 = vmax.f32 %v2002, %v2008
    %v2010 = vsel %vm1999, %v1993, -inf
    %v2011 = vmax.f32 %v2003, %v2010
    %v2012 = vsel %vm1999, %v1994, -inf
    %v2013 = vmax.f32 %v2005, %v2012
    %v2014 = vsel %vm1999, %v1995, -inf
    %v2015 = vmax.f32 %v2007, %v2014
    %v2016 = vsel %vm1999, %v1996, -inf
    %v2017 = vmax.f32 %v2009, %v2016
    %v2018 = vsel %vm1999, %v1997, -inf
    %v2019 = vmax.f32 %v2011, %v2018
    %vm2020 = vcmask 9216
    %v2021 = vsel %vm2020, %v1998, -inf
    %v2022 = vmax.f32 %v2013, %v2021
    %v2023 = vmax.f32 %v2022, %v2015
    %v2024 = vmax.f32 %v2017, %v2019
    %v2025 = vmax.f32 %v2023, %v2024
    %v2026 = vrot.slane %v2025, 4
    %v2027 = vmax.f32 %v2025, %v2026
    %v2028 = vrot.slane %v2027, 2
    %v2029 = vmax.f32 %v2027, %v2028
    %v2030 = vrot.slane %v2029, 1
    %v2031 = vmax.f32 %v2029, %v2030
    %v2032 = vsub.f32 %v1986, %v2031
    %v2033 = vsub.f32 %v1987, %v2031
    %v2034 = vsub.f32 %v1988, %v2031
    %v2035 = vsub.f32 %v1989, %v2031
    %v2036 = vsub.f32 %v1990, %v2031
    %v2037 = vsub.f32 %v1991, %v2031
    %v2038 = vsub.f32 %v1992, %v2031
    %v2039 = vsub.f32 %v1993, %v2031
    %v2040 = vsub.f32 %v1994, %v2031
    %v2041 = vsub.f32 %v1995, %v2031
    %v2042 = vsub.f32 %v1996, %v2031
    %v2043 = vsub.f32 %v1997, %v2031
    %v2044 = vsub.f32 %v1998, %v2031
    %v2045 = vmul.f32 %v2032, 1.442695
    %v2046 = vpow.pop %v2045
    %v2047 = vmul.f32 %v2033, 1.442695
    %v2048 = vpow.pop %v2047
    %v2049 = vmul.f32 %v2034, 1.442695
    %v2050 = vpow.pop %v2049
    %v2051 = vmul.f32 %v2035, 1.442695
    %v2052 = vpow.pop %v2051
    %v2053 = vmul.f32 %v2036, 1.442695
    %v2054 = vpow.pop %v2053
    %v2055 = vmul.f32 %v2037, 1.442695
    %v2056 = vpow.pop %v2055
    %v2057 = vmul.f32 %v2038, 1.442695
    %v2058 = vpow.pop %v2057
    %v2059 = vmul.f32 %v2039, 1.442695
    %v2060 = vpow.pop %v2059
    %v2061 = vmul.f32 %v2040, 1.442695
    %v2062 = vpow.pop %v2061
    %v2063 = vmul.f32 %v2041, 1.442695
    %v2064 = vpow.pop %v2063
    %v2065 = vmul.f32 %v2042, 1.442695
    %v2066 = vpow.pop %v2065
    %v2067 = vmul.f32 %v2043, 1.442695
    %v2068 = vpow.pop %v2067
    %v2069 = vmul.f32 %v2044, 1.442695
    %v2070 = vpow.pop %v2069
    %v2071 = vsel %vm1999, %v2046, 0.0
    %v2072 = vsel %vm1999, %v2048, 0.0
    %v2073 = vadd.f32 %v2071, %v2072
    %v2074 = vsel %vm1999, %v2050, 0.0
    %v2075 = vadd.f32 %v2073, %v2074
    %v2076 = vsel %vm1999, %v2052, 0.0
    %v2077 = vadd.f32 %v2075, %v2076
    %v2078 = vsel %vm1999, %v2054, 0.0
    %v2079 = vadd.f32 %v2077, %v2078
    %v2080 = vsel %vm1999, %v2056, 0.0
    %v2081 = vadd.f32 %v2079, %v2080
    %v2082 = vsel %vm1999, %v2058, 0.0
    %v2083 = vadd.f32 %v2081, %v2082
    %v2084 = vsel %vm1999, %v2060, 0.0
    %v2085 = vadd.f32 %v2083, %v2084
    %v2086 = vsel %vm1999, %v2062, 0.0
    %v2087 = vadd.f32 %v2085, %v2086
    %v2088 = vsel %vm1999, %v2064, 0.0
    %v2089 = vadd.f32 %v2087, %v2088
    %v2090 = vsel %vm1999, %v2066, 0.0
    %v2091 = vadd.f32 %v2089, %v2090
    %v2092 = vsel %vm1999, %v2068, 0.0
    %v2093 = vadd.f32 %v2091, %v2092
    %v2094 = vsel %vm2020, %v2070, 0.0
    %v2095 = vadd.f32 %v2093, %v2094
    %v2096 = vrot.slane %v2095, 4
    %v2097 = vadd.f32 %v2095, %v2096
    %v2098 = vrot.slane %v2097, 2
    %v2099 = vadd.f32 %v2097, %v2098
    %v2100 = vrot.slane %v2099, 1
    %v2101 = vadd.f32 %v2099, %v2100
    %v2102 = vrcp.pop %v2101
    %v2103 = vmul.f32 %v2046, %v2102
    %v2104 = vmul.f32 %v2048, %v2102
    %v2105 = vmul.f32 %v2050, %v2102
    %v2106 = vmul.f32 %v2052, %v2102
    %v2107 = vmul.f32 %v2054, %v2102
    %v2108 = vmul.f32 %v2056, %v2102
    %v2109 = vmul.f32 %v2058, %v2102
    %v2110 = vmul.f32 %v2060, %v2102
    %v2111 = vmul.f32 %v2062, %v2102
    %v2112 = vmul.f32 %v2064, %v2102
    %v2113 = vmul.f32 %v2066, %v2102
    %v2114 = vmul.f32 %v2068, %v2102
    %v2115 = vmul.f32 %v2070, %v2102
    %v2116 = vsel %vm1999, %v2103, 0.0
    %2117 = vadd.xlane.f32.xlu0 %v2116
    %v2118 = vpop.xlane.xlu0 %2117
    %v2119 = vsel %vm1999, %v2104, 0.0
    %2120 = vadd.xlane.f32.xlu0 %v2119
    %v2121 = vpop.xlane.xlu0 %2120
    %v2122 = vsel %vm1999, %v2105, 0.0
    %2123 = vadd.xlane.f32.xlu0 %v2122
    %v2124 = vpop.xlane.xlu0 %2123
    %v2125 = vsel %vm1999, %v2106, 0.0
    %2126 = vadd.xlane.f32.xlu0 %v2125
    %v2127 = vpop.xlane.xlu0 %2126
    %v2128 = vsel %vm1999, %v2107, 0.0
    %2129 = vadd.xlane.f32.xlu0 %v2128
    %v2130 = vpop.xlane.xlu0 %2129
    %v2131 = vsel %vm1999, %v2108, 0.0
    %2132 = vadd.xlane.f32.xlu0 %v2131
    %v2133 = vpop.xlane.xlu0 %2132
    %v2134 = vsel %vm1999, %v2109, 0.0
    %2135 = vadd.xlane.f32.xlu0 %v2134
    %v2136 = vpop.xlane.xlu0 %2135
    %v2137 = vsel %vm1999, %v2110, 0.0
    %2138 = vadd.xlane.f32.xlu0 %v2137
    %v2139 = vpop.xlane.xlu0 %2138
    %v2140 = vsel %vm1999, %v2111, 0.0
    %2141 = vadd.xlane.f32.xlu0 %v2140
    %v2142 = vpop.xlane.xlu0 %2141
    %v2143 = vsel %vm1999, %v2112, 0.0
    %2144 = vadd.xlane.f32.xlu0 %v2143
    %v2145 = vpop.xlane.xlu0 %2144
    %v2146 = vsel %vm1999, %v2113, 0.0
    %2147 = vadd.xlane.f32.xlu0 %v2146
    %v2148 = vpop.xlane.xlu0 %2147
    %v2149 = vsel %vm1999, %v2114, 0.0
    %2150 = vadd.xlane.f32.xlu0 %v2149
    %v2151 = vpop.xlane.xlu0 %2150
    %v2152 = vsel %vm2020, %v2115, 0.0
    %2153 = vadd.xlane.f32.xlu0 %v2152
    %v2154 = vpop.xlane.xlu0 %2153
    %v2155 = vmul.f32 %v2118, %v85
    %v2156 = vmul.f32 %v2118, %v86
    %v2157 = vmul.f32 %v2118, %v87
    %v2158 = vmul.f32 %v2118, %v88
    %v2159 = vmul.f32 %v2121, %v89
    %v2160 = vmul.f32 %v2121, %v90
    %v2161 = vmul.f32 %v2121, %v91
    %v2162 = vmul.f32 %v2121, %v92
    %v2163 = vmul.f32 %v2124, %v93
    %v2164 = vmul.f32 %v2124, %v94
    %v2165 = vmul.f32 %v2124, %v95
    %v2166 = vmul.f32 %v2124, %v96
    %v2167 = vmul.f32 %v2127, %v97
    %v2168 = vmul.f32 %v2127, %v98
    %v2169 = vmul.f32 %v2127, %v99
    %v2170 = vmul.f32 %v2127, %v100
    %v2171 = vmul.f32 %v2130, %v101
    %v2172 = vmul.f32 %v2130, %v102
    %v2173 = vmul.f32 %v2130, %v103
    %v2174 = vmul.f32 %v2130, %v104
    %v2175 = vmul.f32 %v2133, %v105
    %v2176 = vmul.f32 %v2133, %v106
    %v2177 = vmul.f32 %v2133, %v107
    %v2178 = vmul.f32 %v2133, %v108
    %v2179 = vmul.f32 %v2136, %v109
    %v2180 = vmul.f32 %v2136, %v110
    %v2181 = vmul.f32 %v2136, %v111
    %v2182 = vmul.f32 %v2136, %v112
    %v2183 = vmul.f32 %v2139, %v113
    %v2184 = vmul.f32 %v2139, %v114
    %v2185 = vmul.f32 %v2139, %v115
    %v2186 = vmul.f32 %v2139, %v116
    %v2187 = vmul.f32 %v2142, %v117
    %v2188 = vmul.f32 %v2142, %v118
    %v2189 = vmul.f32 %v2142, %v119
    %v2190 = vmul.f32 %v2142, %v120
    %v2191 = vmul.f32 %v2145, %v121
    %v2192 = vmul.f32 %v2145, %v122
    %v2193 = vmul.f32 %v2145, %v123
    %v2194 = vmul.f32 %v2145, %v124
    %v2195 = vmul.f32 %v2148, %v125
    %v2196 = vmul.f32 %v2148, %v126
    %v2197 = vmul.f32 %v2148, %v127
    %v2198 = vmul.f32 %v2148, %v128
    %v2199 = vmul.f32 %v2151, %v129
    %v2200 = vmul.f32 %v2151, %v130
    %v2201 = vmul.f32 %v2151, %v131
    %v2202 = vmul.f32 %v2151, %v132
    %v2203 = vmul.f32 %v2154, %v133
    %v2204 = vmul.f32 %v2154, %v134
    %v2205 = vmul.f32 %v2154, %v135
    %v2206 = vmul.f32 %v2154, %v136
    %2207 = vst [vmem:[#allocation11] sm:$0xff] %v2155
    %2208 = vst [vmem:[#allocation11 + $0x8] sm:$0xff] %v2156
    %2209 = vst [vmem:[#allocation11 + $0x10] sm:$0xff] %v2157
    %2210 = vst [vmem:[#allocation11 + $0x18] sm:$0xff] %v2158
    %2211 = vst [vmem:[#allocation11 + $0x20] sm:$0xff] %v2159
    %2212 = vst [vmem:[#allocation11 + $0x28] sm:$0xff] %v2160
    %2213 = vst [vmem:[#allocation11 + $0x30] sm:$0xff] %v2161
    %2214 = vst [vmem:[#allocation11 + $0x38] sm:$0xff] %v2162
    %2215 = vst [vmem:[#allocation11 + $0x40] sm:$0xff] %v2163
    %2216 = vst [vmem:[#allocation11 + $0x48] sm:$0xff] %v2164
    %2217 = vst [vmem:[#allocation11 + $0x50] sm:$0xff] %v2165
    %2218 = vst [vmem:[#allocation11 + $0x58] sm:$0xff] %v2166
    %2219 = vst [vmem:[#allocation11 + $0x60] sm:$0xff] %v2167
    %2220 = vst [vmem:[#allocation11 + $0x68] sm:$0xff] %v2168
    %2221 = vst [vmem:[#allocation11 + $0x70] sm:$0xff] %v2169
    %2222 = vst [vmem:[#allocation11 + $0x78] sm:$0xff] %v2170
    %2223 = vst [vmem:[#allocation11 + $0x80] sm:$0xff] %v2171
    %2224 = vst [vmem:[#allocation11 + $0x88] sm:$0xff] %v2172
    %2225 = vst [vmem:[#allocation11 + $0x90] sm:$0xff] %v2173
    %2226 = vst [vmem:[#allocation11 + $0x98] sm:$0xff] %v2174
    %2227 = vst [vmem:[#allocation11 + $0xa0] sm:$0xff] %v2175
    %2228 = vst [vmem:[#allocation11 + $0xa8] sm:$0xff] %v2176
    %2229 = vst [vmem:[#allocation11 + $0xb0] sm:$0xff] %v2177
    %2230 = vst [vmem:[#allocation11 + $0xb8] sm:$0xff] %v2178
    %2231 = vst [vmem:[#allocation11 + $0xc0] sm:$0xff] %v2179
    %2232 = vst [vmem:[#allocation11 + $0xc8] sm:$0xff] %v2180
    %2233 = vst [vmem:[#allocation11 + $0xd0] sm:$0xff] %v2181
    %2234 = vst [vmem:[#allocation11 + $0xd8] sm:$0xff] %v2182
    %2235 = vst [vmem:[#allocation11 + $0xe0] sm:$0xff] %v2183
    %2236 = vst [vmem:[#allocation11 + $0xe8] sm:$0xff] %v2184
    %2237 = vst [vmem:[#allocation11 + $0xf0] sm:$0xff] %v2185
    %2238 = vst [vmem:[#allocation11 + $0xf8] sm:$0xff] %v2186
    %2239 = vst [vmem:[#allocation11 + $0x100] sm:$0xff] %v2187
    %2240 = vst [vmem:[#allocation11 + $0x108] sm:$0xff] %v2188
    %2241 = vst [vmem:[#allocation11 + $0x110] sm:$0xff] %v2189
    %2242 = vst [vmem:[#allocation11 + $0x118] sm:$0xff] %v2190
    %2243 = vst [vmem:[#allocation11 + $0x120] sm:$0xff] %v2191
    %2244 = vst [vmem:[#allocation11 + $0x128] sm:$0xff] %v2192
    %2245 = vst [vmem:[#allocation11 + $0x130] sm:$0xff] %v2193
    %2246 = vst [vmem:[#allocation11 + $0x138] sm:$0xff] %v2194
    %2247 = vst [vmem:[#allocation11 + $0x140] sm:$0xff] %v2195
    %2248 = vst [vmem:[#allocation11 + $0x148] sm:$0xff] %v2196
    %2249 = vst [vmem:[#allocation11 + $0x150] sm:$0xff] %v2197
    %2250 = vst [vmem:[#allocation11 + $0x158] sm:$0xff] %v2198
    %2251 = vst [vmem:[#allocation11 + $0x160] sm:$0xff] %v2199
    %2252 = vst [vmem:[#allocation11 + $0x168] sm:$0xff] %v2200
    %2253 = vst [vmem:[#allocation11 + $0x170] sm:$0xff] %v2201
    %2254 = vst [vmem:[#allocation11 + $0x178] sm:$0xff] %v2202
    %2255 = vst [vmem:[#allocation11 + $0x180] sm:$0x3] %v2203
    %2256 = vst [vmem:[#allocation11 + $0x188] sm:$0x3] %v2204
    %2257 = vst [vmem:[#allocation11 + $0x190] sm:$0x3] %v2205
    %2258 = vst [vmem:[#allocation11 + $0x198] sm:$0x3] %v2206
    // Predicated region
    $region50: #{tpu_custom_call.1} parent=1 // pred_check
      _
    $region51: #{tpu_custom_call.1} parent=1 // pred_check_branch
      %2260 = sbr.rel (0) target = $region53
    $region52: #{tpu_custom_call.1} parent=1 // pred_region
      %s2262 = ssub.s32 6656, 6656
      %2263 = vsyncadd [#allocation5], %s2262
      %s2264 = sshll.u32 [#allocation11], 4
      %s2265 = int_to_ptr.vmem [resolvable:$true] %s2264
      %2270 = dma.vmem_to_hbm [thread:$0]  %s2265, 6656, %s8, [#allocation5], 512, 512, 32
    $region53: #{tpu_custom_call.1} parent=1 // pred_fallthru
      _
    // Predicated region
    $region54: #{tpu_custom_call.1} parent=1 // pred_check
      _
    $region55: #{tpu_custom_call.1} parent=1 // pred_check_branch
      %2272 = sbr.rel (0) target = $region57
    $region56: #{tpu_custom_call.1} parent=1 // pred_region
      %2273 = dma.done [#allocation5], 6656
    $region57: #{tpu_custom_call.1} parent=1 // pred_fallthru
      _
    %2274 = vsyncpa [#allocation4], 1
    %2275 = vsyncpa [#allocation7], 1
    %2276 = vsyncpa [#allocation10], 1
    %2277 = vsyncpa [#allocation5], 1

</llo_original>
